<compile_context>
chip_gen: v5e
topology: v5e:2x2
jax: 0.10.0
libtpu: 0.0.40
codegen_flags: <defaults>
</compile_context>

<pallas_src>
import functools

import jax
import jax.numpy as jnp
from jax.experimental import pallas as pl
from jax.experimental.pallas import tpu as pltpu

RELU6_MAX = 6.0
BN_EPS = 1e-5
LANE = 128
SUBLANE = 8


def _round_up(x, m):
    return (x + m - 1) // m * m


# ----------------------------------------------------------------------------
# Fused kernel
# ----------------------------------------------------------------------------
def _fused_ir_kernel(*args, stride, TH, H, W, WcP, has_expand):
    nx = stride  # number of W-phase input refs (1 for stride 1, 2 for stride 2)
    x_refs = args[:nx]
    (we_ref, es_ref, eb_ref, wd_ref, ds_ref, db_ref,
     wp_ref, ps_ref, pb_ref, o_ref, hbuf, dwbuf) = args[nx:]

    Hp = hbuf.shape[-1]        # lane-padded hidden channels
    WoP = dwbuf.shape[1]       # sublane-padded output width
    Cp = o_ref.shape[-1]       # lane-padded output channels
    L = (TH - 1) * stride + 3  # hidden rows (incl. halo) for TH output rows

    r = pl.program_id(1)
    row0 = r * (TH * stride)                       # first padded-input row of tile
    start = pl.multiple_of(row0 * WcP, SUBLANE)    # aligned flat-row offset

    we = we_ref[...]
    wd = wd_ref[...]                               # (3, 3, Hp) f32 (VPU path)
    dsc = ds_ref[...]
    dbi = db_ref[...]
    if has_expand:
        es = es_ref[...]
        eb = eb_ref[...]

    # ---- stage 1: expand 1x1 conv + BN + ReLU6, ONE matmul per W-phase, with
    #      spatial zero padding realized by a mask; single aligned hbuf store.
    row = jax.lax.broadcasted_iota(jnp.int32, (L, WcP, 1), 0) + row0
    row_ok = jnp.logical_and(row >= 1, row <= H)
    for p in range(stride):
        xflat = x_refs[p][0, pl.ds(start, L * WcP), :]          # (L*WcP, Cin)
        e = jnp.dot(xflat, we, preferred_element_type=jnp.float32)
        if has_expand:
            e = jnp.clip(e * es + eb, 0.0, RELU6_MAX)
        e = e.reshape(L, WcP, Hp)                                # aligned split
        col = jax.lax.broadcasted_iota(jnp.int32, (L, WcP, 1), 1) * stride + p
        ok = jnp.logical_and(row_ok, jnp.logical_and(col >= 1, col <= W))
        hbuf[p] = jnp.where(ok, e, 0.0).astype(hbuf.dtype)

    # ---- stage 2: depthwise 3x3 (stride s) + BN + ReLU6 (f32 accumulation).
    if stride == 1:
        # fully vectorized over the row tile: 9 slab FMAs, one clip, one store.
        acc = jnp.zeros((TH, WoP, Hp), jnp.float32)
        for dy in range(3):
            for dx in range(3):
                tap = hbuf[0, dy:dy + TH, dx:dx + WoP, :]
                acc = acc + tap * wd[dy, dx]
        dwbuf[...] = jnp.clip(acc * dsc + dbi, 0.0, RELU6_MAX).astype(dwbuf.dtype)
    else:
        # per-output-row (TH is bounded); stores are full aligned (WoP, Hp) tiles.
        for i in range(TH):
            acc = jnp.zeros((WoP, Hp), jnp.float32)
            for dy in range(3):
                for dx in range(3):
                    tap = hbuf[dx % 2, i * 2 + dy, dx // 2:dx // 2 + WoP, :]
                    acc = acc + tap * wd[dy, dx]
            dwbuf[i] = jnp.clip(acc * dsc + dbi, 0.0, RELU6_MAX).astype(dwbuf.dtype)

    # ---- stage 3: project 1x1 conv + BN, one big-M matmul, lane-dense store.
    y = jnp.dot(dwbuf[...].reshape(TH * WoP, Hp), wp_ref[...],
                preferred_element_type=jnp.float32)
    y = y * ps_ref[...] + pb_ref[...]
    o_ref[0] = y.reshape(TH, WoP, Cp).astype(o_ref.dtype)


# ----------------------------------------------------------------------------
# Wrapper helpers
# ----------------------------------------------------------------------------
def _fold_bn(gamma, beta, mean, var):
    scale = gamma / jnp.sqrt(var + BN_EPS)
    bias = beta - mean * scale
    return scale, bias


def _pad_vec(v, n):
    return jnp.pad(v.astype(jnp.float32), (0, n - v.shape[0])).reshape(1, n)


def _vmem_capacity_bytes():
    try:
        info = pltpu.get_tpu_info()
        for name in ("vmem_capacity_bytes", "vmem_size_bytes", "vmem_bytes"):
            v = getattr(info, name, None)
            if v:
                return int(v)
    except Exception:
        pass
    return 64 << 20  # conservative default (v7x per-TC size)


def _tile_vmem_bytes(th, *, stride, H, WcP, WoP, Hp, Cp, Cin,
                     x_item, w_item, s_item, out_item):
    """Approximate total VMEM for a row tile: scratch + double-buffered input /
    weight / output blocks + largest live f32 values inside the kernel body."""
    L = (th - 1) * stride + 3
    fixed = 2 * stride * (H + 2) * WcP * Cin * x_item                 # inputs
    fixed += 2 * ((Cin * Hp + Hp * Cp) * w_item + (13 * Hp + 2 * Cp) * 4)
    scratch = (stride * L * WcP * Hp + th * WoP * Hp) * s_item
    out = 2 * th * WoP * Cp * out_item
    live = 4 * max(L * WcP * Hp,                # stage-1 f32 matmul result
                   2 * th * WoP * Hp,           # stage-2 f32 accumulator (+temp)
                   th * WoP * (Hp + Cp))        # stage-3 operand + f32 result
    return fixed + scratch + out + live


def _pick_row_tile(Hout, max_th, budget, tile_bytes_fn):
    divisors = [d for d in range(1, Hout + 1) if Hout % d == 0 and d <= max_th]
    if not divisors:
        divisors = [1]
    best = divisors[0]
    for th in divisors:
        if tile_bytes_fn(th) <= budget:
            best = max(best, th)
    return best


# ----------------------------------------------------------------------------
# Forward wrapper
# ----------------------------------------------------------------------------
def inverted_residual_forward(x_nchw, params, *, stride, expand_ratio, inp, oup,
                              row_tile=None, compute_dtype=jnp.bfloat16):
    """Forward pass matching the PyTorch InvertedResidual module (eval-mode BN).

    Accepts / returns NCHW; internally NHWC (channels on the TPU lane dim).
    compute_dtype=float32 gives the exact path; bfloat16 (default) uses bf16 MXU
    operands and bf16 VMEM scratch with f32 accumulation.
    """
    assert stride in (1, 2)
    N, C, H, W = x_nchw.shape
    assert C == inp
    if stride == 2:
        assert H % 2 == 0 and W % 2 == 0, "stride-2 path assumes even spatial dims"
        # TODO(synk): odd spatial sizes (PyTorch handles them via padding) unsupported.
    use_res = (stride == 1 and inp == oup)
    has_expand = (expand_ratio != 1)
    hidden = int(round(inp * expand_ratio))
    Hp = _round_up(hidden, LANE)
    Cp = _round_up(oup, LANE)
    Hout = (H - 1) // stride + 1
    Wout = (W - 1) // stride + 1
    WoP = _round_up(Wout, SUBLANE)            # sublane-padded output width
    WcP = _round_up(WoP + 2, SUBLANE)         # sublane-padded padded-input width (per phase)
    Wc_real = (W + 2) // stride if stride == 2 else W + 2
    scratch_dtype = jnp.float32 if compute_dtype == jnp.float32 else jnp.bfloat16

    # NCHW -> NHWC, 1px zero pad, W-phase split, column pad to WcP, flatten rows,
    # pre-cast to compute_dtype.  One fused XLA copy of the *small* input tensor.
    x_nhwc = jnp.transpose(x_nchw, (0, 2, 3, 1))
    xpad = jnp.pad(x_nhwc, ((0, 0), (1, 1), (1, 1), (0, 0)))
    phases = [xpad] if stride == 1 else [xpad[:, :, 0::2, :], xpad[:, :, 1::2, :]]
    phases = [
        jnp.pad(p, ((0, 0), (0, 0), (0, WcP - Wc_real), (0, 0)))
        .reshape(N, (H + 2) * WcP, inp).astype(compute_dtype)
        for p in phases
    ]

    # Fold BN (inference mode); zero-pad channel dims to lane multiples so every
    # matmul / store inside the kernel is lane-dense (math stays exact).
    if has_expand:
        we = jnp.pad(params["w_expand"], ((0, 0), (0, Hp - hidden)))
        es, eb = _fold_bn(*params["bn_expand"])
    else:
        # identity "expand" doubles as a bandwidth-optimal lane-pad of the input
        # (reading inp channels from HBM and widening to Hp on the MXU is cheaper
        # than padding the input to Hp channels in HBM); BN/ReLU6 are skipped.
        we = jnp.eye(inp, Hp, dtype=jnp.float32)
        es = jnp.ones((hidden,), jnp.float32)
        eb = jnp.zeros((hidden,), jnp.float32)
    wd = jnp.pad(params["w_dw"], ((0, 0), (0, 0), (0, Hp - hidden)))
    dsf, dbf = _fold_bn(*params["bn_dw"])
    wp = jnp.pad(params["w_proj"], ((0, Hp - hidden), (0, Cp - oup)))
    psf, pbf = _fold_bn(*params["bn_proj"])

    we = we.astype(compute_dtype)             # pre-cast MXU weights in the wrapper
    wp = wp.astype(compute_dtype)
    esv, ebv = _pad_vec(es, Hp), _pad_vec(eb, Hp)
    dsv, dbv = _pad_vec(dsf, Hp), _pad_vec(dbf, Hp)
    psv, pbv = _pad_vec(psf, Cp), _pad_vec(pbf, Cp)

    # Generation-aware VMEM budgeting + explicit vmem_limit_bytes.
    x_item = jnp.dtype(compute_dtype).itemsize
    s_item = jnp.dtype(scratch_dtype).itemsize
    out_item = jnp.dtype(x_nchw.dtype).itemsize
    tile_bytes = functools.partial(
        _tile_vmem_bytes, stride=stride, H=H, WcP=WcP, WoP=WoP, Hp=Hp, Cp=Cp,
        Cin=inp, x_item=x_item, w_item=x_item, s_item=s_item, out_item=out_item)
    cap = _vmem_capacity_bytes()
    budget = int(cap * 0.45)

    if row_tile is None:
        max_th = Hout
        if stride == 2:
            max_th = min(max_th, 16)          # bound per-row unrolling (stride-2 path)
        if N < 2 and Hout > 1:
            max_th = min(max_th, max(1, Hout // 2))   # keep >=2 grid steps (megacore)
        TH = _pick_row_tile(Hout, max_th, budget, tile_bytes)
    else:
        TH = row_tile
    assert Hout % TH == 0
    R = Hout // TH
    L = (TH - 1) * stride + 3
    total = tile_bytes(TH)
    vmem_limit = int(min(max(total * 1.3 + (4 << 20), 32 << 20), cap * 0.9))

    kern = functools.partial(_fused_ir_kernel, stride=stride, TH=TH, H=H, W=W,
                             WcP=WcP, has_expand=has_expand)

    x_specs = [pl.BlockSpec((1, (H + 2) * WcP, inp), lambda n, r: (n, 0, 0))
               for _ in range(stride)]
    w_specs = [
        pl.BlockSpec((inp, Hp), lambda n, r: (0, 0)),
        pl.BlockSpec((1, Hp), lambda n, r: (0, 0)),
        pl.BlockSpec((1, Hp), lambda n, r: (0, 0)),
        pl.BlockSpec((3, 3, Hp), lambda n, r: (0, 0, 0)),
        pl.BlockSpec((1, Hp), lambda n, r: (0, 0)),
        pl.BlockSpec((1, Hp), lambda n, r: (0, 0)),
        pl.BlockSpec((Hp, Cp), lambda n, r: (0, 0)),
        pl.BlockSpec((1, Cp), lambda n, r: (0, 0)),
        pl.BlockSpec((1, Cp), lambda n, r: (0, 0)),
    ]

    y = pl.pallas_call(
        kern,
        grid=(N, R),
        in_specs=x_specs + w_specs,
        out_specs=pl.BlockSpec((1, TH, WoP, Cp), lambda n, r: (n, r, 0, 0)),
        out_shape=jax.ShapeDtypeStruct((N, Hout, WoP, Cp), x_nchw.dtype),
        scratch_shapes=[
            pltpu.VMEM((stride, L, WcP, Hp), scratch_dtype),   # hidden tile (masked)
            pltpu.VMEM((TH, WoP, Hp), scratch_dtype),          # depthwise output tile
        ],
        compiler_params=pltpu.CompilerParams(
            dimension_semantics=("parallel", "parallel"),
            vmem_limit_bytes=vmem_limit),
    )(*phases, we, esv, ebv, wd, dsv, dbv, wp, psv, pbv)

    # Un-pad spatial/channels, residual add, NHWC -> NCHW: one fused XLA epilogue
    # on the (small) output tensor.
    y = y[:, :, :Wout, :oup]
    if use_res:
        # TODO(synk): residual add kept in the fused XLA epilogue (adding exact
        # f32 x); an in-kernel add would need a lane-widening of x in VMEM.
        y = y + x_nhwc
    return jnp.transpose(y, (0, 3, 1, 2))


# ----------------------------------------------------------------------------
# Parameter init + pure-JAX reference (for the correctness check)
# ----------------------------------------------------------------------------
def init_params(key, inp, oup, stride, expand_ratio):
    hidden = int(round(inp * expand_ratio))
    ks = iter(jax.random.split(key, 20))

    def bn_params(c):
        gamma = 1.0 + 0.1 * jax.random.normal(next(ks), (c,), jnp.float32)
        beta = 0.1 * jax.random.normal(next(ks), (c,), jnp.float32)
        mean = 0.1 * jax.random.normal(next(ks), (c,), jnp.float32)
        var = jnp.abs(jax.random.normal(next(ks), (c,), jnp.float32)) + 0.5
        return (gamma, beta, mean, var)

    params = {}
    if expand_ratio != 1:
        params["w_expand"] = 0.1 * jax.random.normal(next(ks), (inp, hidden), jnp.float32)
        params["bn_expand"] = bn_params(hidden)
    params["w_dw"] = 0.1 * jax.random.normal(next(ks), (3, 3, hidden), jnp.float32)
    params["bn_dw"] = bn_params(hidden)
    params["w_proj"] = 0.1 * jax.random.normal(next(ks), (hidden, oup), jnp.float32)
    params["bn_proj"] = bn_params(oup)
    return params


def _bn_ref(x, gamma, beta, mean, var):
    return (x - mean) / jnp.sqrt(var + BN_EPS) * gamma + beta


def inverted_residual_ref(x_nchw, params, *, stride, expand_ratio, inp, oup):
    x = jnp.transpose(x_nchw, (0, 2, 3, 1))
    h = x
    dn = ("NHWC", "HWIO", "NHWC")
    if expand_ratio != 1:
        w = params["w_expand"][None, None]
        h = jax.lax.conv_general_dilated(h, w, (1, 1), "VALID", dimension_numbers=dn)
        h = jnp.clip(_bn_ref(h, *params["bn_expand"]), 0.0, RELU6_MAX)
    C = h.shape[-1]
    wd = params["w_dw"][:, :, None, :]
    h = jax.lax.conv_general_dilated(h, wd, (stride, stride), ((1, 1), (1, 1)),
                                     dimension_numbers=dn, feature_group_count=C)
    h = jnp.clip(_bn_ref(h, *params["bn_dw"]), 0.0, RELU6_MAX)
    w = params["w_proj"][None, None]
    h = jax.lax.conv_general_dilated(h, w, (1, 1), "VALID", dimension_numbers=dn)
    h = _bn_ref(h, *params["bn_proj"])
    if stride == 1 and inp == oup:
        h = h + x
    return jnp.transpose(h, (0, 3, 1, 2))


# ----------------------------------------------------------------------------
if __name__ == "__main__":
    key = jax.random.PRNGKey(0)
    kx, kx2, kp1, kp2, kp3, kp4, kp5 = jax.random.split(key, 7)
    N, H, W = 2, 16, 16
    x = jax.random.normal(kx, (N, 4, H, W), jnp.float32)
    x12 = jax.random.normal(kx2, (N, 4, 12, 12), jnp.float32)

    # Case 1: expand_ratio=4, stride=1, residual path, multi-row-tile (exact f32).
    p1 = init_params(kp1, 4, 4, 1, 4)
    y1 = jax.block_until_ready(inverted_residual_forward(
        x, p1, stride=1, expand_ratio=4, inp=4, oup=4,
        row_tile=4, compute_dtype=jnp.float32))
    r1 = inverted_residual_ref(x, p1, stride=1, expand_ratio=4, inp=4, oup=4)
    assert y1.shape == (N, 4, H, W)
    assert jnp.allclose(y1, r1, atol=2e-3, rtol=2e-3), "mismatch (case 1)"

    # Case 2: expand_ratio=2, stride=2, no residual, multi-row-tile (f32).
    p2 = init_params(kp2, 4, 8, 2, 2)
    y2 = jax.block_until_ready(inverted_residual_forward(
        x, p2, stride=2, expand_ratio=2, inp=4, oup=8,
        row_tile=4, compute_dtype=jnp.float32))
    r2 = inverted_residual_ref(x, p2, stride=2, expand_ratio=2, inp=4, oup=8)
    assert y2.shape == (N, 8, H // 2, W // 2)
    assert jnp.allclose(y2, r2, atol=2e-3, rtol=2e-3), "mismatch (case 2)"

    # Case 3: expand_ratio=1 (no expand conv), stride=1, residual, auto row tile.
    p3 = init_params(kp3, 4, 4, 1, 1)
    y3 = jax.block_until_ready(inverted_residual_forward(
        x, p3, stride=1, expand_ratio=1, inp=4, oup=4, compute_dtype=jnp.float32))
    r3 = inverted_residual_ref(x, p3, stride=1, expand_ratio=1, inp=4, oup=4)
    assert jnp.allclose(y3, r3, atol=2e-3, rtol=2e-3), "mismatch (case 3)"

    # Case 4: stride=2 with W not a multiple of 8 (exercises WoP/WcP padding).
    p4 = init_params(kp4, 4, 8, 2, 4)
    y4 = jax.block_until_ready(inverted_residual_forward(
        x12, p4, stride=2, expand_ratio=4, inp=4, oup=8, compute_dtype=jnp.float32))
    r4 = inverted_residual_ref(x12, p4, stride=2, expand_ratio=4, inp=4, oup=8)
    assert y4.shape == (N, 8, 6, 6)
    assert jnp.allclose(y4, r4, atol=2e-3, rtol=2e-3), "mismatch (case 4)"

    # Case 5: stride=1 with W not a multiple of 8, residual, auto row tile.
    p5 = init_params(kp5, 4, 4, 1, 4)
    y5 = jax.block_until_ready(inverted_residual_forward(
        x12, p5, stride=1, expand_ratio=4, inp=4, oup=4, compute_dtype=jnp.float32))
    r5 = inverted_residual_ref(x12, p5, stride=1, expand_ratio=4, inp=4, oup=4)
    assert jnp.allclose(y5, r5, atol=2e-3, rtol=2e-3), "mismatch (case 5)"

    # Default bf16 path (bf16 MXU operands + bf16 VMEM scratch) — looser tolerance.
    yb = jax.block_until_ready(inverted_residual_forward(
        x, p1, stride=1, expand_ratio=4, inp=4, oup=4))
    assert jnp.allclose(yb, r1, atol=0.2, rtol=0.1), "mismatch (bf16 case)"

    print("KERNEL_OK")
</pallas_src>

<mosaic_0001>
module attributes {stable_mosaic.version = 11 : i64} {
  func.func @_fused_ir_kernel(%arg0: i32, %arg1: i32, %arg2: memref<1x432x4xf32, #tpu.memory_space<vmem>>, %arg3: memref<4x128xf32, #tpu.memory_space<vmem>>, %arg4: memref<1x128xf32, #tpu.memory_space<vmem>>, %arg5: memref<1x128xf32, #tpu.memory_space<vmem>>, %arg6: memref<3x3x128xf32, #tpu.memory_space<vmem>>, %arg7: memref<1x128xf32, #tpu.memory_space<vmem>>, %arg8: memref<1x128xf32, #tpu.memory_space<vmem>>, %arg9: memref<128x128xf32, #tpu.memory_space<vmem>>, %arg10: memref<1x128xf32, #tpu.memory_space<vmem>>, %arg11: memref<1x128xf32, #tpu.memory_space<vmem>>, %arg12: memref<1x4x16x128xf32, #tpu.memory_space<vmem>>, %arg13: memref<1x6x24x128xf32, #tpu.memory_space<vmem>>, %arg14: memref<4x16x128xf32, #tpu.memory_space<vmem>>) attributes {dimension_semantics = [#tpu.dimension_semantics<parallel>, #tpu.dimension_semantics<parallel>], iteration_bounds = array<i64: 2, 4>, scalar_prefetch = 0 : i64, scratch_operands = 2 : i64, tpu.core_type = #tpu.core_type<tc>, window_params = [{transform_indices = @transform_0, window_bounds = array<i64: 1, 432, 4>}, {pipeline_mode = #tpu.pipeline_mode<synchronous>, transform_indices = @transform_1, window_bounds = array<i64: 4, 128>}, {pipeline_mode = #tpu.pipeline_mode<synchronous>, transform_indices = @transform_2, window_bounds = array<i64: 1, 128>}, {pipeline_mode = #tpu.pipeline_mode<synchronous>, transform_indices = @transform_3, window_bounds = array<i64: 1, 128>}, {pipeline_mode = #tpu.pipeline_mode<synchronous>, transform_indices = @transform_4, window_bounds = array<i64: 3, 3, 128>}, {pipeline_mode = #tpu.pipeline_mode<synchronous>, transform_indices = @transform_5, window_bounds = array<i64: 1, 128>}, {pipeline_mode = #tpu.pipeline_mode<synchronous>, transform_indices = @transform_6, window_bounds = array<i64: 1, 128>}, {pipeline_mode = #tpu.pipeline_mode<synchronous>, transform_indices = @transform_7, window_bounds = array<i64: 128, 128>}, {pipeline_mode = #tpu.pipeline_mode<synchronous>, transform_indices = @transform_8, window_bounds = array<i64: 1, 128>}, {pipeline_mode = #tpu.pipeline_mode<synchronous>, transform_indices = @transform_9, window_bounds = array<i64: 1, 128>}, {transform_indices = @transform_10, window_bounds = array<i64: 1, 4, 16, 128>}]} {
    %c4_i32 = arith.constant 4 : i32
    %0 = arith.muli %arg1, %c4_i32 : i32
    %c24_i32 = arith.constant 24 : i32
    %1 = arith.muli %0, %c24_i32 : i32
    %2 = tpu.assume_multiple %1, 8 : i32
    %c0 = arith.constant 0 : index
    %c0_0 = arith.constant 0 : index
    %3 = vector.load %arg3[%c0, %c0_0] : memref<4x128xf32, #tpu.memory_space<vmem>>, vector<4x128xf32>
    %c0_1 = arith.constant 0 : index
    %c0_2 = arith.constant 0 : index
    %c0_3 = arith.constant 0 : index
    %4 = vector.load %arg6[%c0_1, %c0_2, %c0_3] : memref<3x3x128xf32, #tpu.memory_space<vmem>>, vector<3x3x128xf32>
    %c0_4 = arith.constant 0 : index
    %c0_5 = arith.constant 0 : index
    %5 = vector.load %arg7[%c0_4, %c0_5] : memref<1x128xf32, #tpu.memory_space<vmem>>, vector<1x128xf32>
    %c0_6 = arith.constant 0 : index
    %c0_7 = arith.constant 0 : index
    %6 = vector.load %arg8[%c0_6, %c0_7] : memref<1x128xf32, #tpu.memory_space<vmem>>, vector<1x128xf32>
    %c0_8 = arith.constant 0 : index
    %c0_9 = arith.constant 0 : index
    %7 = vector.load %arg4[%c0_8, %c0_9] : memref<1x128xf32, #tpu.memory_space<vmem>>, vector<1x128xf32>
    %c0_10 = arith.constant 0 : index
    %c0_11 = arith.constant 0 : index
    %8 = vector.load %arg5[%c0_10, %c0_11] : memref<1x128xf32, #tpu.memory_space<vmem>>, vector<1x128xf32>
    %9 = tpu.iota {dimensions = array<i32: 0>} : vector<6x24x1xi32>
    %10 = vector.broadcast %0 : i32 to vector<6x24x1xi32>
    %11 = arith.addi %9, %10 : vector<6x24x1xi32>
    %c1_i32 = arith.constant 1 : i32
    %12 = vector.broadcast %c1_i32 : i32 to vector<6x24x1xi32>
    %13 = arith.cmpi sge, %11, %12 : vector<6x24x1xi32>
    %c16_i32 = arith.constant 16 : i32
    %14 = vector.broadcast %c16_i32 : i32 to vector<6x24x1xi32>
    %15 = arith.cmpi sle, %11, %14 : vector<6x24x1xi32>
    %16 = arith.andi %13, %15 : vector<6x24x1xi1>
    %c0_12 = arith.constant 0 : index
    %17 = arith.index_cast %2 : i32 to index
    %c0_13 = arith.constant 0 : index
    %18 = vector.load %arg2[%c0_12, %17, %c0_13] : memref<1x432x4xf32, #tpu.memory_space<vmem>>, vector<1x144x4xf32>
    %19 = vector.shape_cast %18 : vector<1x144x4xf32> to vector<144x4xf32>
    %cst = arith.constant dense<0.000000e+00> : vector<144x128xf32>
    %20 = tpu.matmul %19, %3, %cst {dimension_numbers = #tpu.dot_dimension_numbers<[1], [0], [0], [1], [0, 0, 1, 1], [], []>} : vector<144x4xf32>, vector<4x128xf32>, vector<144x128xf32> -> vector<144x128xf32>
    %21 = vector.broadcast %7 : vector<1x128xf32> to vector<144x128xf32>
    %22 = arith.mulf %20, %21 : vector<144x128xf32>
    %23 = vector.broadcast %8 : vector<1x128xf32> to vector<144x128xf32>
    %24 = arith.addf %22, %23 : vector<144x128xf32>
    %cst_14 = arith.constant 0.000000e+00 : f32
    %cst_15 = arith.constant 6.000000e+00 : f32
    %25 = vector.broadcast %cst_14 : f32 to vector<144x128xf32>
    %26 = arith.maximumf %25, %24 : vector<144x128xf32>
    %27 = vector.broadcast %cst_15 : f32 to vector<144x128xf32>
    %28 = arith.minimumf %27, %26 : vector<144x128xf32>
    %29 = vector.shape_cast %28 : vector<144x128xf32> to vector<6x24x128xf32>
    %30 = tpu.iota {dimensions = array<i32: 1>} : vector<6x24x1xi32>
    %c1_i32_16 = arith.constant 1 : i32
    %31 = vector.broadcast %c1_i32_16 : i32 to vector<6x24x1xi32>
    %32 = arith.muli %30, %31 : vector<6x24x1xi32>
    %c0_i32 = arith.constant 0 : i32
    %33 = vector.broadcast %c0_i32 : i32 to vector<6x24x1xi32>
    %34 = arith.addi %32, %33 : vector<6x24x1xi32>
    %c1_i32_17 = arith.constant 1 : i32
    %35 = vector.broadcast %c1_i32_17 : i32 to vector<6x24x1xi32>
    %36 = arith.cmpi sge, %34, %35 : vector<6x24x1xi32>
    %c16_i32_18 = arith.constant 16 : i32
    %37 = vector.broadcast %c16_i32_18 : i32 to vector<6x24x1xi32>
    %38 = arith.cmpi sle, %34, %37 : vector<6x24x1xi32>
    %39 = arith.andi %36, %38 : vector<6x24x1xi1>
    %40 = arith.andi %16, %39 : vector<6x24x1xi1>
    %cst_19 = arith.constant 0.000000e+00 : f32
    %41 = vector.shape_cast %40 : vector<6x24x1xi1> to vector<6x24x1xi1>
    %42 = vector.broadcast %41 : vector<6x24x1xi1> to vector<6x24x128xi1>
    %43 = vector.broadcast %cst_19 : f32 to vector<6x24x128xf32>
    %44 = arith.select %42, %29, %43 : vector<6x24x128xi1>, vector<6x24x128xf32>
    %c0_20 = arith.constant 0 : index
    %c0_21 = arith.constant 0 : index
    %c0_22 = arith.constant 0 : index
    %c0_23 = arith.constant 0 : index
    %45 = vector.load %arg13[%c0_20, %c0_21, %c0_22, %c0_23] : memref<1x6x24x128xf32, #tpu.memory_space<vmem>>, vector<1x6x24x128xf32>
    %46 = vector.shape_cast %45 : vector<1x6x24x128xf32> to vector<6x24x128xf32>
    %47 = vector.shape_cast %44 : vector<6x24x128xf32> to vector<1x6x24x128xf32>
    tpu.vector_store %arg13[%c0_20, %c0_21, %c0_22, %c0_23], %47 {strides = array<i32>} : memref<1x6x24x128xf32, #tpu.memory_space<vmem>>, vector<1x6x24x128xf32>,
    %cst_24 = arith.constant 0.000000e+00 : f32
    %48 = vector.broadcast %cst_24 : f32 to vector<4x16x128xf32>
    %c0_25 = arith.constant 0 : index
    %c0_26 = arith.constant 0 : index
    %c0_27 = arith.constant 0 : index
    %c0_28 = arith.constant 0 : index
    %49 = vector.load %arg13[%c0_25, %c0_26, %c0_27, %c0_28] : memref<1x6x24x128xf32, #tpu.memory_space<vmem>>, vector<1x4x16x128xf32>
    %50 = vector.shape_cast %49 : vector<1x4x16x128xf32> to vector<4x16x128xf32>
    %51 = vector.extract_strided_slice %4 {offsets = [0, 0, 0], sizes = [1, 1, 128], strides = [1, 1, 1]} : vector<3x3x128xf32> to vector<1x1x128xf32>
    %52 = vector.shape_cast %51 : vector<1x1x128xf32> to vector<128xf32>
    %53 = vector.shape_cast %52 : vector<128xf32> to vector<1x1x128xf32>
    %54 = vector.broadcast %53 : vector<1x1x128xf32> to vector<4x16x128xf32>
    %55 = arith.mulf %50, %54 : vector<4x16x128xf32>
    %56 = arith.addf %48, %55 : vector<4x16x128xf32>
    %c0_29 = arith.constant 0 : index
    %c0_30 = arith.constant 0 : index
    %c1 = arith.constant 1 : index
    %c0_31 = arith.constant 0 : index
    %57 = vector.load %arg13[%c0_29, %c0_30, %c1, %c0_31] : memref<1x6x24x128xf32, #tpu.memory_space<vmem>>, vector<1x4x16x128xf32>
    %58 = vector.shape_cast %57 : vector<1x4x16x128xf32> to vector<4x16x128xf32>
    %59 = vector.extract_strided_slice %4 {offsets = [0, 1, 0], sizes = [1, 1, 128], strides = [1, 1, 1]} : vector<3x3x128xf32> to vector<1x1x128xf32>
    %60 = vector.shape_cast %59 : vector<1x1x128xf32> to vector<128xf32>
    %61 = vector.shape_cast %60 : vector<128xf32> to vector<1x1x128xf32>
    %62 = vector.broadcast %61 : vector<1x1x128xf32> to vector<4x16x128xf32>
    %63 = arith.mulf %58, %62 : vector<4x16x128xf32>
    %64 = arith.addf %56, %63 : vector<4x16x128xf32>
    %c0_32 = arith.constant 0 : index
    %c0_33 = arith.constant 0 : index
    %c2 = arith.constant 2 : index
    %c0_34 = arith.constant 0 : index
    %65 = vector.load %arg13[%c0_32, %c0_33, %c2, %c0_34] : memref<1x6x24x128xf32, #tpu.memory_space<vmem>>, vector<1x4x16x128xf32>
    %66 = vector.shape_cast %65 : vector<1x4x16x128xf32> to vector<4x16x128xf32>
    %67 = vector.extract_strided_slice %4 {offsets = [0, 2, 0], sizes = [1, 1, 128], strides = [1, 1, 1]} : vector<3x3x128xf32> to vector<1x1x128xf32>
    %68 = vector.shape_cast %67 : vector<1x1x128xf32> to vector<128xf32>
    %69 = vector.shape_cast %68 : vector<128xf32> to vector<1x1x128xf32>
    %70 = vector.broadcast %69 : vector<1x1x128xf32> to vector<4x16x128xf32>
    %71 = arith.mulf %66, %70 : vector<4x16x128xf32>
    %72 = arith.addf %64, %71 : vector<4x16x128xf32>
    %c0_35 = arith.constant 0 : index
    %c1_36 = arith.constant 1 : index
    %c0_37 = arith.constant 0 : index
    %c0_38 = arith.constant 0 : index
    %73 = vector.load %arg13[%c0_35, %c1_36, %c0_37, %c0_38] : memref<1x6x24x128xf32, #tpu.memory_space<vmem>>, vector<1x4x16x128xf32>
    %74 = vector.shape_cast %73 : vector<1x4x16x128xf32> to vector<4x16x128xf32>
    %75 = vector.extract_strided_slice %4 {offsets = [1, 0, 0], sizes = [1, 1, 128], strides = [1, 1, 1]} : vector<3x3x128xf32> to vector<1x1x128xf32>
    %76 = vector.shape_cast %75 : vector<1x1x128xf32> to vector<128xf32>
    %77 = vector.shape_cast %76 : vector<128xf32> to vector<1x1x128xf32>
    %78 = vector.broadcast %77 : vector<1x1x128xf32> to vector<4x16x128xf32>
    %79 = arith.mulf %74, %78 : vector<4x16x128xf32>
    %80 = arith.addf %72, %79 : vector<4x16x128xf32>
    %c0_39 = arith.constant 0 : index
    %c1_40 = arith.constant 1 : index
    %c1_41 = arith.constant 1 : index
    %c0_42 = arith.constant 0 : index
    %81 = vector.load %arg13[%c0_39, %c1_40, %c1_41, %c0_42] : memref<1x6x24x128xf32, #tpu.memory_space<vmem>>, vector<1x4x16x128xf32>
    %82 = vector.shape_cast %81 : vector<1x4x16x128xf32> to vector<4x16x128xf32>
    %83 = vector.extract_strided_slice %4 {offsets = [1, 1, 0], sizes = [1, 1, 128], strides = [1, 1, 1]} : vector<3x3x128xf32> to vector<1x1x128xf32>
    %84 = vector.shape_cast %83 : vector<1x1x128xf32> to vector<128xf32>
    %85 = vector.shape_cast %84 : vector<128xf32> to vector<1x1x128xf32>
    %86 = vector.broadcast %85 : vector<1x1x128xf32> to vector<4x16x128xf32>
    %87 = arith.mulf %82, %86 : vector<4x16x128xf32>
    %88 = arith.addf %80, %87 : vector<4x16x128xf32>
    %c0_43 = arith.constant 0 : index
    %c1_44 = arith.constant 1 : index
    %c2_45 = arith.constant 2 : index
    %c0_46 = arith.constant 0 : index
    %89 = vector.load %arg13[%c0_43, %c1_44, %c2_45, %c0_46] : memref<1x6x24x128xf32, #tpu.memory_space<vmem>>, vector<1x4x16x128xf32>
    %90 = vector.shape_cast %89 : vector<1x4x16x128xf32> to vector<4x16x128xf32>
    %91 = vector.extract_strided_slice %4 {offsets = [1, 2, 0], sizes = [1, 1, 128], strides = [1, 1, 1]} : vector<3x3x128xf32> to vector<1x1x128xf32>
    %92 = vector.shape_cast %91 : vector<1x1x128xf32> to vector<128xf32>
    %93 = vector.shape_cast %92 : vector<128xf32> to vector<1x1x128xf32>
    %94 = vector.broadcast %93 : vector<1x1x128xf32> to vector<4x16x128xf32>
    %95 = arith.mulf %90, %94 : vector<4x16x128xf32>
    %96 = arith.addf %88, %95 : vector<4x16x128xf32>
    %c0_47 = arith.constant 0 : index
    %c2_48 = arith.constant 2 : index
    %c0_49 = arith.constant 0 : index
    %c0_50 = arith.constant 0 : index
    %97 = vector.load %arg13[%c0_47, %c2_48, %c0_49, %c0_50] : memref<1x6x24x128xf32, #tpu.memory_space<vmem>>, vector<1x4x16x128xf32>
    %98 = vector.shape_cast %97 : vector<1x4x16x128xf32> to vector<4x16x128xf32>
    %99 = vector.extract_strided_slice %4 {offsets = [2, 0, 0], sizes = [1, 1, 128], strides = [1, 1, 1]} : vector<3x3x128xf32> to vector<1x1x128xf32>
    %100 = vector.shape_cast %99 : vector<1x1x128xf32> to vector<128xf32>
    %101 = vector.shape_cast %100 : vector<128xf32> to vector<1x1x128xf32>
    %102 = vector.broadcast %101 : vector<1x1x128xf32> to vector<4x16x128xf32>
    %103 = arith.mulf %98, %102 : vector<4x16x128xf32>
    %104 = arith.addf %96, %103 : vector<4x16x128xf32>
    %c0_51 = arith.constant 0 : index
    %c2_52 = arith.constant 2 : index
    %c1_53 = arith.constant 1 : index
    %c0_54 = arith.constant 0 : index
    %105 = vector.load %arg13[%c0_51, %c2_52, %c1_53, %c0_54] : memref<1x6x24x128xf32, #tpu.memory_space<vmem>>, vector<1x4x16x128xf32>
    %106 = vector.shape_cast %105 : vector<1x4x16x128xf32> to vector<4x16x128xf32>
    %107 = vector.extract_strided_slice %4 {offsets = [2, 1, 0], sizes = [1, 1, 128], strides = [1, 1, 1]} : vector<3x3x128xf32> to vector<1x1x128xf32>
    %108 = vector.shape_cast %107 : vector<1x1x128xf32> to vector<128xf32>
    %109 = vector.shape_cast %108 : vector<128xf32> to vector<1x1x128xf32>
    %110 = vector.broadcast %109 : vector<1x1x128xf32> to vector<4x16x128xf32>
    %111 = arith.mulf %106, %110 : vector<4x16x128xf32>
    %112 = arith.addf %104, %111 : vector<4x16x128xf32>
    %c0_55 = arith.constant 0 : index
    %c2_56 = arith.constant 2 : index
    %c2_57 = arith.constant 2 : index
    %c0_58 = arith.constant 0 : index
    %113 = vector.load %arg13[%c0_55, %c2_56, %c2_57, %c0_58] : memref<1x6x24x128xf32, #tpu.memory_space<vmem>>, vector<1x4x16x128xf32>
    %114 = vector.shape_cast %113 : vector<1x4x16x128xf32> to vector<4x16x128xf32>
    %115 = vector.extract_strided_slice %4 {offsets = [2, 2, 0], sizes = [1, 1, 128], strides = [1, 1, 1]} : vector<3x3x128xf32> to vector<1x1x128xf32>
    %116 = vector.shape_cast %115 : vector<1x1x128xf32> to vector<128xf32>
    %117 = vector.shape_cast %116 : vector<128xf32> to vector<1x1x128xf32>
    %118 = vector.broadcast %117 : vector<1x1x128xf32> to vector<4x16x128xf32>
    %119 = arith.mulf %114, %118 : vector<4x16x128xf32>
    %120 = arith.addf %112, %119 : vector<4x16x128xf32>
    %121 = vector.shape_cast %5 : vector<1x128xf32> to vector<1x1x128xf32>
    %122 = vector.broadcast %121 : vector<1x1x128xf32> to vector<4x16x128xf32>
    %123 = arith.mulf %120, %122 : vector<4x16x128xf32>
    %124 = vector.shape_cast %6 : vector<1x128xf32> to vector<1x1x128xf32>
    %125 = vector.broadcast %124 : vector<1x1x128xf32> to vector<4x16x128xf32>
    %126 = arith.addf %123, %125 : vector<4x16x128xf32>
    %cst_59 = arith.constant 0.000000e+00 : f32
    %cst_60 = arith.constant 6.000000e+00 : f32
    %127 = vector.broadcast %cst_59 : f32 to vector<4x16x128xf32>
    %128 = arith.maximumf %127, %126 : vector<4x16x128xf32>
    %129 = vector.broadcast %cst_60 : f32 to vector<4x16x128xf32>
    %130 = arith.minimumf %129, %128 : vector<4x16x128xf32>
    %c0_61 = arith.constant 0 : index
    %c0_62 = arith.constant 0 : index
    %c0_63 = arith.constant 0 : index
    %131 = vector.load %arg14[%c0_61, %c0_62, %c0_63] : memref<4x16x128xf32, #tpu.memory_space<vmem>>, vector<4x16x128xf32>
    tpu.vector_store %arg14[%c0_61, %c0_62, %c0_63], %130 {strides = array<i32>} : memref<4x16x128xf32, #tpu.memory_space<vmem>>, vector<4x16x128xf32>,
    %c0_64 = arith.constant 0 : index
    %c0_65 = arith.constant 0 : index
    %c0_66 = arith.constant 0 : index
    %132 = vector.load %arg14[%c0_64, %c0_65, %c0_66] : memref<4x16x128xf32, #tpu.memory_space<vmem>>, vector<4x16x128xf32>
    %133 = vector.shape_cast %132 : vector<4x16x128xf32> to vector<64x128xf32>
    %c0_67 = arith.constant 0 : index
    %c0_68 = arith.constant 0 : index
    %134 = vector.load %arg9[%c0_67, %c0_68] : memref<128x128xf32, #tpu.memory_space<vmem>>, vector<128x128xf32>
    %cst_69 = arith.constant dense<0.000000e+00> : vector<64x128xf32>
    %135 = tpu.matmul %133, %134, %cst_69 {dimension_numbers = #tpu.dot_dimension_numbers<[1], [0], [0], [1], [0, 0, 1, 1], [], []>} : vector<64x128xf32>, vector<128x128xf32>, vector<64x128xf32> -> vector<64x128xf32>
    %c0_70 = arith.constant 0 : index
    %c0_71 = arith.constant 0 : index
    %136 = vector.load %arg10[%c0_70, %c0_71] : memref<1x128xf32, #tpu.memory_space<vmem>>, vector<1x128xf32>
    %137 = vector.broadcast %136 : vector<1x128xf32> to vector<64x128xf32>
    %138 = arith.mulf %135, %137 : vector<64x128xf32>
    %c0_72 = arith.constant 0 : index
    %c0_73 = arith.constant 0 : index
    %139 = vector.load %arg11[%c0_72, %c0_73] : memref<1x128xf32, #tpu.memory_space<vmem>>, vector<1x128xf32>
    %140 = vector.broadcast %139 : vector<1x128xf32> to vector<64x128xf32>
    %141 = arith.addf %138, %140 : vector<64x128xf32>
    %142 = vector.shape_cast %141 : vector<64x128xf32> to vector<4x16x128xf32>
    %c0_74 = arith.constant 0 : index
    %c0_75 = arith.constant 0 : index
    %c0_76 = arith.constant 0 : index
    %c0_77 = arith.constant 0 : index
    %143 = vector.load %arg12[%c0_74, %c0_75, %c0_76, %c0_77] : memref<1x4x16x128xf32, #tpu.memory_space<vmem>>, vector<1x4x16x128xf32>
    %144 = vector.shape_cast %143 : vector<1x4x16x128xf32> to vector<4x16x128xf32>
    %145 = vector.shape_cast %142 : vector<4x16x128xf32> to vector<1x4x16x128xf32>
    tpu.vector_store %arg12[%c0_74, %c0_75, %c0_76, %c0_77], %145 {strides = array<i32>} : memref<1x4x16x128xf32, #tpu.memory_space<vmem>>, vector<1x4x16x128xf32>,
    return
  }
  func.func @transform_0(%arg0: i32, %arg1: i32) -> (i32, i32, i32) {
    %c0_i32 = arith.constant 0 : i32
    %c0_i32_0 = arith.constant 0 : i32
    %c0_i32_1 = arith.constant 0 : i32
    return %arg0, %c0_i32, %c0_i32_0 : i32, i32, i32
  }
  func.func @transform_1(%arg0: i32, %arg1: i32) -> (i32, i32) {
    %c0_i32 = arith.constant 0 : i32
    %c0_i32_0 = arith.constant 0 : i32
    %c0_i32_1 = arith.constant 0 : i32
    return %c0_i32, %c0_i32_0 : i32, i32
  }
  func.func @transform_2(%arg0: i32, %arg1: i32) -> (i32, i32) {
    %c0_i32 = arith.constant 0 : i32
    %c0_i32_0 = arith.constant 0 : i32
    %c0_i32_1 = arith.constant 0 : i32
    return %c0_i32, %c0_i32_0 : i32, i32
  }
  func.func @transform_3(%arg0: i32, %arg1: i32) -> (i32, i32) {
    %c0_i32 = arith.constant 0 : i32
    %c0_i32_0 = arith.constant 0 : i32
    %c0_i32_1 = arith.constant 0 : i32
    return %c0_i32, %c0_i32_0 : i32, i32
  }
  func.func @transform_4(%arg0: i32, %arg1: i32) -> (i32, i32, i32) {
    %c0_i32 = arith.constant 0 : i32
    %c0_i32_0 = arith.constant 0 : i32
    %c0_i32_1 = arith.constant 0 : i32
    %c0_i32_2 = arith.constant 0 : i32
    return %c0_i32, %c0_i32_0, %c0_i32_1 : i32, i32, i32
  }
  func.func @transform_5(%arg0: i32, %arg1: i32) -> (i32, i32) {
    %c0_i32 = arith.constant 0 : i32
    %c0_i32_0 = arith.constant 0 : i32
    %c0_i32_1 = arith.constant 0 : i32
    return %c0_i32, %c0_i32_0 : i32, i32
  }
  func.func @transform_6(%arg0: i32, %arg1: i32) -> (i32, i32) {
    %c0_i32 = arith.constant 0 : i32
    %c0_i32_0 = arith.constant 0 : i32
    %c0_i32_1 = arith.constant 0 : i32
    return %c0_i32, %c0_i32_0 : i32, i32
  }
  func.func @transform_7(%arg0: i32, %arg1: i32) -> (i32, i32) {
    %c0_i32 = arith.constant 0 : i32
    %c0_i32_0 = arith.constant 0 : i32
    %c0_i32_1 = arith.constant 0 : i32
    return %c0_i32, %c0_i32_0 : i32, i32
  }
  func.func @transform_8(%arg0: i32, %arg1: i32) -> (i32, i32) {
    %c0_i32 = arith.constant 0 : i32
    %c0_i32_0 = arith.constant 0 : i32
    %c0_i32_1 = arith.constant 0 : i32
    return %c0_i32, %c0_i32_0 : i32, i32
  }
  func.func @transform_9(%arg0: i32, %arg1: i32) -> (i32, i32) {
    %c0_i32 = arith.constant 0 : i32
    %c0_i32_0 = arith.constant 0 : i32
    %c0_i32_1 = arith.constant 0 : i32
    return %c0_i32, %c0_i32_0 : i32, i32
  }
  func.func @transform_10(%arg0: i32, %arg1: i32) -> (i32, i32, i32, i32) {
    %c0_i32 = arith.constant 0 : i32
    %c0_i32_0 = arith.constant 0 : i32
    %c0_i32_1 = arith.constant 0 : i32
    return %arg0, %arg1, %c0_i32, %c0_i32_0 : i32, i32, i32, i32
  }
}

</mosaic_0001>

<llo_original>
// kernel: tpu_custom_call.1
$region0: #{tpu_custom_call.1}
  #allocation0 [shape = 'u32[]', space=smem, size = 0x4, offset = 0x4, fixed_abs, tag = 'smem constant byte address 0x4 - core index']
  #allocation1 [shape = 'u32[72,128]{1,0:T(1,128)}', space=vmem, size = 0x9000, scoped, tag = 'internal scratch']
  #allocation2 [shape = 'f32[1,6,24,128]{3,2,1,0:T(8,128)}', space=vmem, size = 0x12000, scoped, tag = 'scratch operand']
  #allocation3 [shape = 'f32[4,16,128]{2,1,0:T(8,128)}', space=vmem, size = 0x8000, scoped, tag = 'scratch operand']
  %s0 = inlined_call_operand.vmem [shape: f32[2,432,4], index: 0, kind: input, shape index: {}]
  %s1 = inlined_call_operand.vmem [shape: f32[4,128], index: 1, kind: input, shape index: {}]
  %s2 = inlined_call_operand.vmem [shape: f32[1,128], index: 2, kind: input, shape index: {}]
  %s3 = inlined_call_operand.vmem [shape: f32[1,128], index: 3, kind: input, shape index: {}]
  %s4 = inlined_call_operand.vmem [shape: f32[3,3,128], index: 4, kind: input, shape index: {}]
  %s5 = inlined_call_operand.vmem [shape: f32[1,128], index: 5, kind: input, shape index: {}]
  %s6 = inlined_call_operand.vmem [shape: f32[1,128], index: 6, kind: input, shape index: {}]
  %s7 = inlined_call_operand.vmem [shape: f32[128,128], index: 7, kind: input, shape index: {}]
  %s8 = inlined_call_operand.vmem [shape: f32[1,128], index: 8, kind: input, shape index: {}]
  %s9 = inlined_call_operand.vmem [shape: f32[1,128], index: 9, kind: input, shape index: {}]
  %s10 = inlined_call_operand.hbm [shape: f32[2,16,16,128], index: 10, kind: output, shape index: {}]
  %s11 = sld [smem:[#allocation0]]
  $region73: #{tpu_custom_call.1} parent=0
    _
  %s13 = ssub.s32 1, %s11
  %s14 = scalar_select 0, %s13, %s11
  $region1: #{tpu_custom_call.1} parent=0
    #allocation4 [shape = 'u8[65536]{0}', space=vmem, size = 0x10000, scoped, tag = 'output window, operand 0']
    #allocation5 [shape = 's32[2]{0}', space=sflag, size = 0x8, scoped, tag = 'scoped memory for tpu_custom_call.1']
    %15 = vsyncpa [#allocation5], 0
    %s16 = scalar_lea.sflag [#allocation5], 1
    %17 = vsyncpa %s16, 0
    loop: start=0, step=1, limit=10
    $region2: #{tpu_custom_call.1} parent=1 // loop_pre_header
      _
    $region3: #{tpu_custom_call.1} parent=1 // loop_header
      %s19 = sphi 0, %s23
      %p20 = scmp.ge.s32.totalorder %s19, 10
      %s26 = sphi 0, %s38
      %s27 = sphi 0, %s34
      %s28 = sphi 0, %s26
      %s29 = sphi 0, %s27
      %s30 = sphi 0, %s28
      %s31 = sphi 0, %s29
      %s41 = sphi 0, %s43
      %s44 = sphi 0, %s41
      %s45 = sphi 0, %s44
      %s61 = sphi 0, %s45
      %s65 = sphi 0, %s65
      %s67 = sphi 0, %s65
      %s68 = sphi 0, %s67
      %s82 = sphi 0, %s68
      %s86 = sphi 0, %s86
      %s88 = sphi 0, %s86
      %s89 = sphi 0, %s88
      %s103 = sphi 0, %s89
      %s107 = sphi 0, %s107
      %s109 = sphi 0, %s107
      %s110 = sphi 0, %s109
      %s124 = sphi 0, %s110
      %s128 = sphi 0, %s128
      %s130 = sphi 0, %s128
      %s131 = sphi 0, %s130
      %s145 = sphi 0, %s131
      %s149 = sphi 0, %s149
      %s151 = sphi 0, %s149
      %s152 = sphi 0, %s151
      %s166 = sphi 0, %s152
      %s170 = sphi 0, %s170
      %s172 = sphi 0, %s170
      %s173 = sphi 0, %s172
      %s187 = sphi 0, %s173
      %s191 = sphi 0, %s191
      %s193 = sphi 0, %s191
      %s194 = sphi 0, %s193
      %s208 = sphi 0, %s194
      %s212 = sphi 0, %s212
      %s214 = sphi 0, %s212
      %s215 = sphi 0, %s214
      %s229 = sphi 0, %s215
      %s233 = sphi 0, %s233
      %s235 = sphi 0, %s233
      %s236 = sphi 0, %s235
      %s250 = sphi 0, %s236
      %s258 = sphi 0, %s260
      %s261 = sphi 0, %s258
      %s262 = sphi 0, %s261
      %s278 = sphi 0, %s262
    $region4: #{tpu_custom_call.1} parent=1 // loop_header_branch
      %22 = sbr.rel (%p20) target = $region8
    $region5: #{tpu_custom_call.1} parent=1 // loop_body
      %s24 = ssub.s32 %s19, 1
      %s25 = ssub.s32 %s19, 2
      %s32 = sadd.s32 1, %s27
      %p33 = scmp.ge.s32.totalorder %s32, 4
      %s34 = scalar_select %p33, 0, %s32
      %s35 = sadd.s32 1, %s26
      %s36 = scalar_select %p33, %s35, %s26
      %p37 = scmp.ge.s32.totalorder %s36, 2
      %s38 = scalar_select %p37, 0, %s36
      %s39 = ssub.s32 %s26, %s38
      %p40 = scmp.eq.s32.totalorder %s39, 0
      %s42 = sadd.s32 %s41, 1
      %s43 = scalar_select %p40, %s41, %s42
      %p46 = pneg %p40
      %p47 = scmp.eq.s32.totalorder %s19, 7
      %p48 = por %p46, %p47
      %p49 = scmp.ne.s32.totalorder %s41, %s44
      %p50 = scmp.eq.s32.totalorder %s19, 0
      %p51 = por %p49, %p50
      %p52 = scmp.ne.s32.totalorder %s41, %s44
      %p53 = scmp.eq.s32.totalorder %s24, 7
      %p54 = por %p52, %p53
      %p55 = scmp.ne.s32.totalorder %s44, %s45
      %p56 = scmp.eq.s32.totalorder %s24, 0
      %p57 = por %p55, %p56
      %p58 = scmp.ne.s32.totalorder %s44, %s45
      %p59 = scmp.eq.s32.totalorder %s25, 7
      %p60 = por %p58, %p59
      %p62 = scmp.ne.s32.totalorder %s45, %s61
      %p63 = scmp.eq.s32.totalorder %s25, 0
      %p64 = por %p62, %p63
      %s66 = sadd.s32 %s65, 1
      %p69 = scmp.eq.s32.totalorder %s19, 7
      %p70 = scmp.ne.s32.totalorder %s65, %s67
      %p71 = scmp.eq.s32.totalorder %s19, 0
      %p72 = por %p70, %p71
      %p73 = scmp.ne.s32.totalorder %s65, %s67
      %p74 = scmp.eq.s32.totalorder %s24, 7
      %p75 = por %p73, %p74
      %p76 = scmp.ne.s32.totalorder %s67, %s68
      %p77 = scmp.eq.s32.totalorder %s24, 0
      %p78 = por %p76, %p77
      %p79 = scmp.ne.s32.totalorder %s67, %s68
      %p80 = scmp.eq.s32.totalorder %s25, 7
      %p81 = por %p79, %p80
      %p83 = scmp.ne.s32.totalorder %s68, %s82
      %p84 = scmp.eq.s32.totalorder %s25, 0
      %p85 = por %p83, %p84
      %s87 = sadd.s32 %s86, 1
      %p90 = scmp.eq.s32.totalorder %s19, 7
      %p91 = scmp.ne.s32.totalorder %s86, %s88
      %p92 = scmp.eq.s32.totalorder %s19, 0
      %p93 = por %p91, %p92
      %p94 = scmp.ne.s32.totalorder %s86, %s88
      %p95 = scmp.eq.s32.totalorder %s24, 7
      %p96 = por %p94, %p95
      %p97 = scmp.ne.s32.totalorder %s88, %s89
      %p98 = scmp.eq.s32.totalorder %s24, 0
      %p99 = por %p97, %p98
      %p100 = scmp.ne.s32.totalorder %s88, %s89
      %p101 = scmp.eq.s32.totalorder %s25, 7
      %p102 = por %p100, %p101
      %p104 = scmp.ne.s32.totalorder %s89, %s103
      %p105 = scmp.eq.s32.totalorder %s25, 0
      %p106 = por %p104, %p105
      %s108 = sadd.s32 %s107, 1
      %p111 = scmp.eq.s32.totalorder %s19, 7
      %p112 = scmp.ne.s32.totalorder %s107, %s109
      %p113 = scmp.eq.s32.totalorder %s19, 0
      %p114 = por %p112, %p113
      %p115 = scmp.ne.s32.totalorder %s107, %s109
      %p116 = scmp.eq.s32.totalorder %s24, 7
      %p117 = por %p115, %p116
      %p118 = scmp.ne.s32.totalorder %s109, %s110
      %p119 = scmp.eq.s32.totalorder %s24, 0
      %p120 = por %p118, %p119
      %p121 = scmp.ne.s32.totalorder %s109, %s110
      %p122 = scmp.eq.s32.totalorder %s25, 7
      %p123 = por %p121, %p122
      %p125 = scmp.ne.s32.totalorder %s110, %s124
      %p126 = scmp.eq.s32.totalorder %s25, 0
      %p127 = por %p125, %p126
      %s129 = sadd.s32 %s128, 1
      %p132 = scmp.eq.s32.totalorder %s19, 7
      %p133 = scmp.ne.s32.totalorder %s128, %s130
      %p134 = scmp.eq.s32.totalorder %s19, 0
      %p135 = por %p133, %p134
      %p136 = scmp.ne.s32.totalorder %s128, %s130
      %p137 = scmp.eq.s32.totalorder %s24, 7
      %p138 = por %p136, %p137
      %p139 = scmp.ne.s32.totalorder %s130, %s131
      %p140 = scmp.eq.s32.totalorder %s24, 0
      %p141 = por %p139, %p140
      %p142 = scmp.ne.s32.totalorder %s130, %s131
      %p143 = scmp.eq.s32.totalorder %s25, 7
      %p144 = por %p142, %p143
      %p146 = scmp.ne.s32.totalorder %s131, %s145
      %p147 = scmp.eq.s32.totalorder %s25, 0
      %p148 = por %p146, %p147
      %s150 = sadd.s32 %s149, 1
      %p153 = scmp.eq.s32.totalorder %s19, 7
      %p154 = scmp.ne.s32.totalorder %s149, %s151
      %p155 = scmp.eq.s32.totalorder %s19, 0
      %p156 = por %p154, %p155
      %p157 = scmp.ne.s32.totalorder %s149, %s151
      %p158 = scmp.eq.s32.totalorder %s24, 7
      %p159 = por %p157, %p158
      %p160 = scmp.ne.s32.totalorder %s151, %s152
      %p161 = scmp.eq.s32.totalorder %s24, 0
      %p162 = por %p160, %p161
      %p163 = scmp.ne.s32.totalorder %s151, %s152
      %p164 = scmp.eq.s32.totalorder %s25, 7
      %p165 = por %p163, %p164
      %p167 = scmp.ne.s32.totalorder %s152, %s166
      %p168 = scmp.eq.s32.totalorder %s25, 0
      %p169 = por %p167, %p168
      %s171 = sadd.s32 %s170, 1
      %p174 = scmp.eq.s32.totalorder %s19, 7
      %p175 = scmp.ne.s32.totalorder %s170, %s172
      %p176 = scmp.eq.s32.totalorder %s19, 0
      %p177 = por %p175, %p176
      %p178 = scmp.ne.s32.totalorder %s170, %s172
      %p179 = scmp.eq.s32.totalorder %s24, 7
      %p180 = por %p178, %p179
      %p181 = scmp.ne.s32.totalorder %s172, %s173
      %p182 = scmp.eq.s32.totalorder %s24, 0
      %p183 = por %p181, %p182
      %p184 = scmp.ne.s32.totalorder %s172, %s173
      %p185 = scmp.eq.s32.totalorder %s25, 7
      %p186 = por %p184, %p185
      %p188 = scmp.ne.s32.totalorder %s173, %s187
      %p189 = scmp.eq.s32.totalorder %s25, 0
      %p190 = por %p188, %p189
      %s192 = sadd.s32 %s191, 1
      %p195 = scmp.eq.s32.totalorder %s19, 7
      %p196 = scmp.ne.s32.totalorder %s191, %s193
      %p197 = scmp.eq.s32.totalorder %s19, 0
      %p198 = por %p196, %p197
      %p199 = scmp.ne.s32.totalorder %s191, %s193
      %p200 = scmp.eq.s32.totalorder %s24, 7
      %p201 = por %p199, %p200
      %p202 = scmp.ne.s32.totalorder %s193, %s194
      %p203 = scmp.eq.s32.totalorder %s24, 0
      %p204 = por %p202, %p203
      %p205 = scmp.ne.s32.totalorder %s193, %s194
      %p206 = scmp.eq.s32.totalorder %s25, 7
      %p207 = por %p205, %p206
      %p209 = scmp.ne.s32.totalorder %s194, %s208
      %p210 = scmp.eq.s32.totalorder %s25, 0
      %p211 = por %p209, %p210
      %s213 = sadd.s32 %s212, 1
      %p216 = scmp.eq.s32.totalorder %s19, 7
      %p217 = scmp.ne.s32.totalorder %s212, %s214
      %p218 = scmp.eq.s32.totalorder %s19, 0
      %p219 = por %p217, %p218
      %p220 = scmp.ne.s32.totalorder %s212, %s214
      %p221 = scmp.eq.s32.totalorder %s24, 7
      %p222 = por %p220, %p221
      %p223 = scmp.ne.s32.totalorder %s214, %s215
      %p224 = scmp.eq.s32.totalorder %s24, 0
      %p225 = por %p223, %p224
      %p226 = scmp.ne.s32.totalorder %s214, %s215
      %p227 = scmp.eq.s32.totalorder %s25, 7
      %p228 = por %p226, %p227
      %p230 = scmp.ne.s32.totalorder %s215, %s229
      %p231 = scmp.eq.s32.totalorder %s25, 0
      %p232 = por %p230, %p231
      %s234 = sadd.s32 %s233, 1
      %p237 = scmp.eq.s32.totalorder %s19, 7
      %p238 = scmp.ne.s32.totalorder %s233, %s235
      %p239 = scmp.eq.s32.totalorder %s19, 0
      %p240 = por %p238, %p239
      %p241 = scmp.ne.s32.totalorder %s233, %s235
      %p242 = scmp.eq.s32.totalorder %s24, 7
      %p243 = por %p241, %p242
      %p244 = scmp.ne.s32.totalorder %s235, %s236
      %p245 = scmp.eq.s32.totalorder %s24, 0
      %p246 = por %p244, %p245
      %p247 = scmp.ne.s32.totalorder %s235, %s236
      %p248 = scmp.eq.s32.totalorder %s25, 7
      %p249 = por %p247, %p248
      %p251 = scmp.ne.s32.totalorder %s236, %s250
      %p252 = scmp.eq.s32.totalorder %s25, 0
      %p253 = por %p251, %p252
      %s254 = ssub.s32 %s26, %s38
      %s255 = ssub.s32 %s27, %s34
      %s256 = sor.u32 %s254, %s255
      %p257 = scmp.eq.s32.totalorder %s256, 0
      %s259 = sadd.s32 %s258, 1
      %s260 = scalar_select %p257, %s258, %s259
      %p263 = pneg %p257
      %p264 = scmp.eq.s32.totalorder %s19, 7
      %p265 = por %p263, %p264
      %p266 = scmp.ne.s32.totalorder %s258, %s261
      %p267 = scmp.eq.s32.totalorder %s19, 0
      %p268 = por %p266, %p267
      %p269 = scmp.ne.s32.totalorder %s258, %s261
      %p270 = scmp.eq.s32.totalorder %s24, 7
      %p271 = por %p269, %p270
      %p272 = scmp.ne.s32.totalorder %s261, %s262
      %p273 = scmp.eq.s32.totalorder %s24, 0
      %p274 = por %p272, %p273
      %p275 = scmp.ne.s32.totalorder %s261, %s262
      %p276 = scmp.eq.s32.totalorder %s25, 7
      %p277 = por %p275, %p276
      %p279 = scmp.ne.s32.totalorder %s262, %s278
      %p280 = scmp.eq.s32.totalorder %s25, 0
      %p281 = por %p279, %p280
      %p282 = scmp.le.s32.totalorder 1, %s19
      %p283 = scmp.lt.s32.totalorder %s19, 9
      %p284 = pnand %p282, %p283
      %p285 = pneg %p284
      // Predicated region
      $region9: #{tpu_custom_call.1} parent=5 // pred_check
        _
      $region10: #{tpu_custom_call.1} parent=5 // pred_check_branch
        %287 = sbr.rel (%p284) target = $region12
      $region11: #{tpu_custom_call.1} parent=5 // pred_region
        %s288 = ssub.s32 %s19, 1
        // Predicated region
        $region13: #{tpu_custom_call.1} parent=11 // pred_check
          %p289 = pneg %p78
        $region14: #{tpu_custom_call.1} parent=11 // pred_check_branch
          %291 = sbr.rel (%p289) target = $region16
        $region15: #{tpu_custom_call.1} parent=11 // pred_region
          _
        $region16: #{tpu_custom_call.1} parent=11 // pred_fallthru
          _
        // Predicated region
        $region17: #{tpu_custom_call.1} parent=11 // pred_check
          %p292 = pneg %p99
        $region18: #{tpu_custom_call.1} parent=11 // pred_check_branch
          %294 = sbr.rel (%p292) target = $region20
        $region19: #{tpu_custom_call.1} parent=11 // pred_region
          _
        $region20: #{tpu_custom_call.1} parent=11 // pred_fallthru
          _
        // Predicated region
        $region21: #{tpu_custom_call.1} parent=11 // pred_check
          %p295 = pneg %p120
        $region22: #{tpu_custom_call.1} parent=11 // pred_check_branch
          %297 = sbr.rel (%p295) target = $region24
        $region23: #{tpu_custom_call.1} parent=11 // pred_region
          _
        $region24: #{tpu_custom_call.1} parent=11 // pred_fallthru
          _
        // Predicated region
        $region25: #{tpu_custom_call.1} parent=11 // pred_check
          %p298 = pneg %p141
        $region26: #{tpu_custom_call.1} parent=11 // pred_check_branch
          %300 = sbr.rel (%p298) target = $region28
        $region27: #{tpu_custom_call.1} parent=11 // pred_region
          _
        $region28: #{tpu_custom_call.1} parent=11 // pred_fallthru
          _
        // Predicated region
        $region29: #{tpu_custom_call.1} parent=11 // pred_check
          %p301 = pneg %p162
        $region30: #{tpu_custom_call.1} parent=11 // pred_check_branch
          %303 = sbr.rel (%p301) target = $region32
        $region31: #{tpu_custom_call.1} parent=11 // pred_region
          _
        $region32: #{tpu_custom_call.1} parent=11 // pred_fallthru
          _
        // Predicated region
        $region33: #{tpu_custom_call.1} parent=11 // pred_check
          %p304 = pneg %p183
        $region34: #{tpu_custom_call.1} parent=11 // pred_check_branch
          %306 = sbr.rel (%p304) target = $region36
        $region35: #{tpu_custom_call.1} parent=11 // pred_region
          _
        $region36: #{tpu_custom_call.1} parent=11 // pred_fallthru
          _
        // Predicated region
        $region37: #{tpu_custom_call.1} parent=11 // pred_check
          %p307 = pneg %p204
        $region38: #{tpu_custom_call.1} parent=11 // pred_check_branch
          %309 = sbr.rel (%p307) target = $region40
        $region39: #{tpu_custom_call.1} parent=11 // pred_region
          _
        $region40: #{tpu_custom_call.1} parent=11 // pred_fallthru
          _
        // Predicated region
        $region41: #{tpu_custom_call.1} parent=11 // pred_check
          %p310 = pneg %p225
        $region42: #{tpu_custom_call.1} parent=11 // pred_check_branch
          %312 = sbr.rel (%p310) target = $region44
        $region43: #{tpu_custom_call.1} parent=11 // pred_region
          _
        $region44: #{tpu_custom_call.1} parent=11 // pred_fallthru
          _
        // Predicated region
        $region45: #{tpu_custom_call.1} parent=11 // pred_check
          %p313 = pneg %p246
        $region46: #{tpu_custom_call.1} parent=11 // pred_check_branch
          %315 = sbr.rel (%p313) target = $region48
        $region47: #{tpu_custom_call.1} parent=11 // pred_region
          _
        $region48: #{tpu_custom_call.1} parent=11 // pred_fallthru
          _
      $region12: #{tpu_custom_call.1} parent=5 // pred_fallthru
        _
      %p316 = scmp.lt.s32.totalorder %s19, 8
      // Predicated region
      $region49: #{tpu_custom_call.1} parent=5 // pred_check
        %p317 = pneg %p316
      $region50: #{tpu_custom_call.1} parent=5 // pred_check_branch
        %319 = sbr.rel (%p317) target = $region52
      $region51: #{tpu_custom_call.1} parent=5 // pred_region
        // Predicated region
        $region53: #{tpu_custom_call.1} parent=51 // pred_check
          %p320 = pneg %p51
        $region54: #{tpu_custom_call.1} parent=51 // pred_check_branch
          %322 = sbr.rel (%p320) target = $region56
        $region55: #{tpu_custom_call.1} parent=51 // pred_region
          %p323 = scmp.lt.s32.totalorder %s26, 1
          %s324 = scalar_select %p323, %s26, 1
          %s325 = smul.addr %s324, 54
          %s326 = smul.addr %s325, 8
          %s327 = scalar_lea.vmem %s0, %s326
        $region56: #{tpu_custom_call.1} parent=51 // pred_fallthru
          _
      $region52: #{tpu_custom_call.1} parent=5 // pred_fallthru
        _
      %p328 = scmp.le.s32.totalorder 1, %s19
      %p329 = scmp.lt.s32.totalorder %s19, 9
      %p330 = pnand %p328, %p329
      %p331 = pneg %p330
      // Predicated region
      $region57: #{tpu_custom_call.1} parent=5 // pred_check
        _
      $region58: #{tpu_custom_call.1} parent=5 // pred_check_branch
        %333 = sbr.rel (%p330) target = $region60
      $region59: #{tpu_custom_call.1} parent=5 // pred_region
        %s334 = ssub.s32 %s19, 1
        %p335 = scmp.lt.s32.totalorder %s28, 1
        %s336 = scalar_select %p335, %s28, 1
        %s337 = smul.addr %s336, 54
        %s338 = smul.addr %s337, 8
        %s339 = scalar_lea.vmem %s0, %s338
        %p340 = pneg %p57
        %p341 = pneg %p54
        %p342 = pneg %p78
        %p343 = pneg %p75
        %p344 = pneg %p99
        %p345 = pneg %p96
        %p346 = pneg %p120
        %p347 = pneg %p117
        %p348 = pneg %p141
        %p349 = pneg %p138
        %p350 = pneg %p162
        %p351 = pneg %p159
        %p352 = pneg %p183
        %p353 = pneg %p180
        %p354 = pneg %p204
        %p355 = pneg %p201
        %p356 = pneg %p225
        %p357 = pneg %p222
        %p358 = pneg %p246
        %p359 = pneg %p243
        %p360 = pneg %p274
        %p361 = pneg %p271
        %s362 = sand.u32 %s261, 1
        %s363 = scalar_lea.sflag [#allocation5], %s362
        %s364 = sand.u32 %s261, 1
        %s365 = smul.addr %s364, 64
        %s366 = scalar_lea.vmem [#allocation4], %s365
        %p367 = scmp.lt.s32.totalorder %s28, 1
        %s368 = scalar_select %p367, %s28, 1
        %s369 = smul.addr %s368, 54
        %s370 = smul.addr %s369, 8
        %s371 = scalar_lea.vmem %s0, %s370
        %s372 = smul.u32 4, %s29
        %s373 = smul.u32 %s29, 4
        %s374 = smul.u32 %s29, 96
        %v375 = vld [vmem:[%s1] sm:$0xf]
        %v376 = vld [vmem:[%s4] sm:$0x7]
        %v377 = vld [vmem:[%s4 + $0x4] sm:$0x7]
        %v378 = vld [vmem:[%s4 + $0x8] sm:$0x7]
        %v379 = vld [vmem:[%s5] sm:$0x1]
        %v380 = vld [vmem:[%s6] sm:$0x1]
        %v381 = vld [vmem:[%s2] sm:$0x1]
        %v382 = vld [vmem:[%s3] sm:$0x1]
        %v383 = vstv %s373
        %v384 = vadd.s32 %v383, 1
        %v385 = vadd.s32 %v383, 2
        %v386 = vadd.s32 %v383, 3
        %v387 = vadd.s32 %v383, 4
        %v388 = vadd.s32 %v383, 5
        %vm389 = vcmp.ge.s32.totalorder %v383, 1
        %vm390 = vcmp.ge.s32.totalorder %v384, 1
        %vm391 = vcmp.ge.s32.totalorder %v385, 1
        %vm392 = vcmp.ge.s32.totalorder %v386, 1
        %vm393 = vcmp.ge.s32.totalorder %v387, 1
        %vm394 = vcmp.ge.s32.totalorder %v388, 1
        %vm395 = vcmp.le.s32.totalorder %v383, 16
        %vm396 = vcmp.le.s32.totalorder %v384, 16
        %vm397 = vcmp.le.s32.totalorder %v385, 16
        %vm398 = vcmp.le.s32.totalorder %v386, 16
        %vm399 = vcmp.le.s32.totalorder %v387, 16
        %vm400 = vcmp.le.s32.totalorder %v388, 16
        %vm401 = vmand %vm389, %vm395
        %vm402 = vmand %vm390, %vm396
        %vm403 = vmand %vm391, %vm397
        %vm404 = vmand %vm392, %vm398
        %vm405 = vmand %vm393, %vm399
        %vm406 = vmand %vm394, %vm400
        %s407 = scalar_lea.vmem %s371, %s374
        %v408 = vld [vmem:[%s407] sm:$0xff]
        %v409 = vld [vmem:[%s407 + $0x8] sm:$0xff]
        %v410 = vld [vmem:[%s407 + $0x10] sm:$0xff]
        %v411 = vld [vmem:[%s407 + $0x18] sm:$0xff]
        %v412 = vld [vmem:[%s407 + $0x20] sm:$0xff]
        %v413 = vld [vmem:[%s407 + $0x28] sm:$0xff]
        %v414 = vld [vmem:[%s407 + $0x30] sm:$0xff]
        %v415 = vld [vmem:[%s407 + $0x38] sm:$0xff]
        %v416 = vld [vmem:[%s407 + $0x40] sm:$0xff]
        %v417 = vld [vmem:[%s407 + $0x48] sm:$0xff]
        %v418 = vld [vmem:[%s407 + $0x50] sm:$0xff]
        %v419 = vld [vmem:[%s407 + $0x58] sm:$0xff]
        %v420 = vld [vmem:[%s407 + $0x60] sm:$0xff]
        %v421 = vld [vmem:[%s407 + $0x68] sm:$0xff]
        %v422 = vld [vmem:[%s407 + $0x70] sm:$0xff]
        %v423 = vld [vmem:[%s407 + $0x78] sm:$0xff]
        %v424 = vld [vmem:[%s407 + $0x80] sm:$0xff]
        %v425 = vld [vmem:[%s407 + $0x88] sm:$0xff]
        %vm426 = vcmask 31744
        %v428 = vsel %vm426, %v408, 0
        %v431 = vsel %vm426, %v409, 0
        %v434 = vsel %vm426, %v410, 0
        %v437 = vsel %vm426, %v411, 0
        %v440 = vsel %vm426, %v412, 0
        %v443 = vsel %vm426, %v413, 0
        %v446 = vsel %vm426, %v414, 0
        %v449 = vsel %vm426, %v415, 0
        %v452 = vsel %vm426, %v416, 0
        %v455 = vsel %vm426, %v417, 0
        %v458 = vsel %vm426, %v418, 0
        %v461 = vsel %vm426, %v419, 0
        %v464 = vsel %vm426, %v420, 0
        %v467 = vsel %vm426, %v421, 0
        %v470 = vsel %vm426, %v422, 0
        %v473 = vsel %vm426, %v423, 0
        %v476 = vsel %vm426, %v424, 0
        %v479 = vsel %vm426, %v425, 0
        %vm481 = vcmask 1043456
        %v483 = vsel %vm481, %v375, 0
        %485 = vmatpush.msra.mxu0 0.0
        %486 = vmatpush.msra.mxu0 0.0
        %487 = vmatpush.msra.mxu0 0.0
        %488 = vmatpush.msra.mxu0 0.0
        %489 = vmatpush.msra.mxu0 0.0
        %490 = vmatpush.msra.mxu0 0.0
        %491 = vmatpush.msra.mxu0 0.0
        %492 = vmatpush.msra.mxu0 0.0
        %493 = vmatpush.msra.mxu0 0.0
        %494 = vmatpush.msra.mxu0 0.0
        %495 = vmatpush.msra.mxu0 0.0
        %496 = vmatpush.msra.mxu0 0.0
        %497 = vmatpush.msra.mxu0 0.0
        %498 = vmatpush.msra.mxu0 0.0
        %499 = vmatpush.msra.mxu0 0.0
        %500 = vmatpush.msra.mxu0 %v483
        %501 = vmatmul.f32.gmra.mxu0 %v428
        %v502 = vpop.f32.mrf.mxu0
        %v503 = vadd.f32 0.0, %v502
        %504 = vmatmul.f32.gmra.mxu0 %v431
        %v505 = vpop.f32.mrf.mxu0
        %v506 = vadd.f32 0.0, %v505
        %507 = vmatmul.f32.gmra.mxu0 %v434
        %v508 = vpop.f32.mrf.mxu0
        %v509 = vadd.f32 0.0, %v508
        %510 = vmatmul.f32.gmra.mxu0 %v437
        %v511 = vpop.f32.mrf.mxu0
        %v512 = vadd.f32 0.0, %v511
        %513 = vmatmul.f32.gmra.mxu0 %v440
        %v514 = vpop.f32.mrf.mxu0
        %v515 = vadd.f32 0.0, %v514
        %516 = vmatmul.f32.gmra.mxu0 %v443
        %v517 = vpop.f32.mrf.mxu0
        %v518 = vadd.f32 0.0, %v517
        %519 = vmatmul.f32.gmra.mxu0 %v446
        %v520 = vpop.f32.mrf.mxu0
        %v521 = vadd.f32 0.0, %v520
        %522 = vmatmul.f32.gmra.mxu0 %v449
        %v523 = vpop.f32.mrf.mxu0
        %v524 = vadd.f32 0.0, %v523
        %525 = vmatmul.f32.gmra.mxu0 %v452
        %v526 = vpop.f32.mrf.mxu0
        %v527 = vadd.f32 0.0, %v526
        %528 = vmatmul.f32.gmra.mxu0 %v455
        %v529 = vpop.f32.mrf.mxu0
        %v530 = vadd.f32 0.0, %v529
        %531 = vmatmul.f32.gmra.mxu0 %v458
        %v532 = vpop.f32.mrf.mxu0
        %v533 = vadd.f32 0.0, %v532
        %534 = vmatmul.f32.gmra.mxu0 %v461
        %v535 = vpop.f32.mrf.mxu0
        %v536 = vadd.f32 0.0, %v535
        %537 = vmatmul.f32.gmra.mxu0 %v464
        %v538 = vpop.f32.mrf.mxu0
        %v539 = vadd.f32 0.0, %v538
        %540 = vmatmul.f32.gmra.mxu0 %v467
        %v541 = vpop.f32.mrf.mxu0
        %v542 = vadd.f32 0.0, %v541
        %543 = vmatmul.f32.gmra.mxu0 %v470
        %v544 = vpop.f32.mrf.mxu0
        %v545 = vadd.f32 0.0, %v544
        %546 = vmatmul.f32.gmra.mxu0 %v473
        %v547 = vpop.f32.mrf.mxu0
        %v548 = vadd.f32 0.0, %v547
        %549 = vmatmul.f32.gmra.mxu0 %v476
        %v550 = vpop.f32.mrf.mxu0
        %v551 = vadd.f32 0.0, %v550
        %552 = vmatmul.f32.gmra.mxu0 %v479
        %v553 = vpop.f32.mrf.mxu0
        %v554 = vadd.f32 0.0, %v553
        %555 = vdwg.mxu0
        %v557 = vperm.slane %v381, 0
        %v559 = vmul.f32 %v503, %v557
        %v560 = vmul.f32 %v506, %v557
        %v561 = vmul.f32 %v509, %v557
        %v562 = vmul.f32 %v512, %v557
        %v563 = vmul.f32 %v515, %v557
        %v564 = vmul.f32 %v518, %v557
        %v565 = vmul.f32 %v521, %v557
        %v566 = vmul.f32 %v524, %v557
        %v567 = vmul.f32 %v527, %v557
        %v568 = vmul.f32 %v530, %v557
        %v569 = vmul.f32 %v533, %v557
        %v570 = vmul.f32 %v536, %v557
        %v571 = vmul.f32 %v539, %v557
        %v572 = vmul.f32 %v542, %v557
        %v573 = vmul.f32 %v545, %v557
        %v574 = vmul.f32 %v548, %v557
        %v575 = vmul.f32 %v551, %v557
        %v576 = vmul.f32 %v554, %v557
        %v578 = vperm.slane %v382, 0
        %v580 = vadd.f32 %v559, %v578
        %v581 = vadd.f32 %v560, %v578
        %v582 = vadd.f32 %v561, %v578
        %v583 = vadd.f32 %v562, %v578
        %v584 = vadd.f32 %v563, %v578
        %v585 = vadd.f32 %v564, %v578
        %v586 = vadd.f32 %v565, %v578
        %v587 = vadd.f32 %v566, %v578
        %v588 = vadd.f32 %v567, %v578
        %v589 = vadd.f32 %v568, %v578
        %v590 = vadd.f32 %v569, %v578
        %v591 = vadd.f32 %v570, %v578
        %v592 = vadd.f32 %v571, %v578
        %v593 = vadd.f32 %v572, %v578
        %v594 = vadd.f32 %v573, %v578
        %v595 = vadd.f32 %v574, %v578
        %v596 = vadd.f32 %v575, %v578
        %v597 = vadd.f32 %v576, %v578
        %v598 = vmax.f32 %v580, 0.0
        %v599 = vmax.f32 %v581, 0.0
        %v600 = vmax.f32 %v582, 0.0
        %v601 = vmax.f32 %v583, 0.0
        %v602 = vmax.f32 %v584, 0.0
        %v603 = vmax.f32 %v585, 0.0
        %v604 = vmax.f32 %v586, 0.0
        %v605 = vmax.f32 %v587, 0.0
        %v606 = vmax.f32 %v588, 0.0
        %v607 = vmax.f32 %v589, 0.0
        %v608 = vmax.f32 %v590, 0.0
        %v609 = vmax.f32 %v591, 0.0
        %v610 = vmax.f32 %v592, 0.0
        %v611 = vmax.f32 %v593, 0.0
        %v612 = vmax.f32 %v594, 0.0
        %v613 = vmax.f32 %v595, 0.0
        %v614 = vmax.f32 %v596, 0.0
        %v615 = vmax.f32 %v597, 0.0
        %v616 = vmin.f32 %v598, 6.0
        %v617 = vmin.f32 %v599, 6.0
        %v618 = vmin.f32 %v600, 6.0
        %v619 = vmin.f32 %v601, 6.0
        %v620 = vmin.f32 %v602, 6.0
        %v621 = vmin.f32 %v603, 6.0
        %v622 = vmin.f32 %v604, 6.0
        %v623 = vmin.f32 %v605, 6.0
        %v624 = vmin.f32 %v606, 6.0
        %v625 = vmin.f32 %v607, 6.0
        %v626 = vmin.f32 %v608, 6.0
        %v627 = vmin.f32 %v609, 6.0
        %v628 = vmin.f32 %v610, 6.0
        %v629 = vmin.f32 %v611, 6.0
        %v630 = vmin.f32 %v612, 6.0
        %v631 = vmin.f32 %v613, 6.0
        %v632 = vmin.f32 %v614, 6.0
        %v633 = vmin.f32 %v615, 6.0
        %v634 = vlaneseq
        %v635 = vshrl.u32 %v634, 7
        %v636 = vadd.s32 %v635, 8
        %v637 = vadd.s32 %v635, 16
        %vm638 = vcmp.ge.s32.totalorder %v635, 1
        %vm639 = vcmp.ge.s32.totalorder %v636, 1
        %vm640 = vcmp.ge.s32.totalorder %v637, 1
        %vm641 = vcmp.le.s32.totalorder %v635, 16
        %vm642 = vcmp.le.s32.totalorder %v636, 16
        %vm643 = vcmp.le.s32.totalorder %v637, 16
        %vm644 = vmand %vm638, %vm641
        %vm645 = vmand %vm639, %vm642
        %vm646 = vmand %vm640, %vm643
        %vm647 = vmand %vm401, %vm644
        %vm648 = vmand %vm401, %vm645
        %vm649 = vmand %vm401, %vm646
        %vm650 = vmand %vm402, %vm644
        %vm651 = vmand %vm402, %vm645
        %vm652 = vmand %vm402, %vm646
        %vm653 = vmand %vm403, %vm644
        %vm654 = vmand %vm403, %vm645
        %vm655 = vmand %vm403, %vm646
        %vm656 = vmand %vm404, %vm644
        %vm657 = vmand %vm404, %vm645
        %vm658 = vmand %vm404, %vm646
        %vm659 = vmand %vm405, %vm644
        %vm660 = vmand %vm405, %vm645
        %vm661 = vmand %vm405, %vm646
        %vm662 = vmand %vm406, %vm644
        %vm663 = vmand %vm406, %vm645
        %vm664 = vmand %vm406, %vm646
        %v665 = vsel %vm647, 1, 0
        %v666 = vsel %vm648, 1, 0
        %v667 = vsel %vm649, 1, 0
        %v668 = vsel %vm650, 1, 0
        %v669 = vsel %vm651, 1, 0
        %v670 = vsel %vm652, 1, 0
        %v671 = vsel %vm653, 1, 0
        %v672 = vsel %vm654, 1, 0
        %v673 = vsel %vm655, 1, 0
        %v674 = vsel %vm656, 1, 0
        %v675 = vsel %vm657, 1, 0
        %v676 = vsel %vm658, 1, 0
        %v677 = vsel %vm659, 1, 0
        %v678 = vsel %vm660, 1, 0
        %v679 = vsel %vm661, 1, 0
        %v680 = vsel %vm662, 1, 0
        %v681 = vsel %vm663, 1, 0
        %v682 = vsel %vm664, 1, 0
        %vm683 = vcmp.eq.s32.totalorder %v665, 1
        %vm684 = vcmp.eq.s32.totalorder %v666, 1
        %vm685 = vcmp.eq.s32.totalorder %v667, 1
        %vm686 = vcmp.eq.s32.totalorder %v668, 1
        %vm687 = vcmp.eq.s32.totalorder %v669, 1
        %vm688 = vcmp.eq.s32.totalorder %v670, 1
        %vm689 = vcmp.eq.s32.totalorder %v671, 1
        %vm690 = vcmp.eq.s32.totalorder %v672, 1
        %vm691 = vcmp.eq.s32.totalorder %v673, 1
        %vm692 = vcmp.eq.s32.totalorder %v674, 1
        %vm693 = vcmp.eq.s32.totalorder %v675, 1
        %vm694 = vcmp.eq.s32.totalorder %v676, 1
        %vm695 = vcmp.eq.s32.totalorder %v677, 1
        %vm696 = vcmp.eq.s32.totalorder %v678, 1
        %vm697 = vcmp.eq.s32.totalorder %v679, 1
        %vm698 = vcmp.eq.s32.totalorder %v680, 1
        %vm699 = vcmp.eq.s32.totalorder %v681, 1
        %vm700 = vcmp.eq.s32.totalorder %v682, 1
        %v701 = vsel %vm683, %v616, 0.0
        %v702 = vsel %vm684, %v617, 0.0
        %v703 = vsel %vm685, %v618, 0.0
        %v704 = vsel %vm686, %v619, 0.0
        %v705 = vsel %vm687, %v620, 0.0
        %v706 = vsel %vm688, %v621, 0.0
        %v707 = vsel %vm689, %v622, 0.0
        %v708 = vsel %vm690, %v623, 0.0
        %v709 = vsel %vm691, %v624, 0.0
        %v710 = vsel %vm692, %v625, 0.0
        %v711 = vsel %vm693, %v626, 0.0
        %v712 = vsel %vm694, %v627, 0.0
        %v713 = vsel %vm695, %v628, 0.0
        %v714 = vsel %vm696, %v629, 0.0
        %v715 = vsel %vm697, %v630, 0.0
        %v716 = vsel %vm698, %v631, 0.0
        %v717 = vsel %vm699, %v632, 0.0
        %v718 = vsel %vm700, %v633, 0.0
        %719 = vst [vmem:[#allocation2] sm:$0xff] %v701
        %720 = vst [vmem:[#allocation2 + $0x8] sm:$0xff] %v702
        %721 = vst [vmem:[#allocation2 + $0x10] sm:$0xff] %v703
        %722 = vst [vmem:[#allocation2 + $0x18] sm:$0xff] %v704
        %723 = vst [vmem:[#allocation2 + $0x20] sm:$0xff] %v705
        %724 = vst [vmem:[#allocation2 + $0x28] sm:$0xff] %v706
        %725 = vst [vmem:[#allocation2 + $0x30] sm:$0xff] %v707
        %726 = vst [vmem:[#allocation2 + $0x38] sm:$0xff] %v708
        %727 = vst [vmem:[#allocation2 + $0x40] sm:$0xff] %v709
        %728 = vst [vmem:[#allocation2 + $0x48] sm:$0xff] %v710
        %729 = vst [vmem:[#allocation2 + $0x50] sm:$0xff] %v711
        %730 = vst [vmem:[#allocation2 + $0x58] sm:$0xff] %v712
        %731 = vst [vmem:[#allocation2 + $0x60] sm:$0xff] %v713
        %732 = vst [vmem:[#allocation2 + $0x68] sm:$0xff] %v714
        %733 = vst [vmem:[#allocation2 + $0x70] sm:$0xff] %v715
        %734 = vst [vmem:[#allocation2 + $0x78] sm:$0xff] %v716
        %735 = vst [vmem:[#allocation2 + $0x80] sm:$0xff] %v717
        %736 = vst [vmem:[#allocation2 + $0x88] sm:$0xff] %v718
        %v737 = vld [vmem:[#allocation2] sm:$0xff]
        %v738 = vld [vmem:[#allocation2 + $0x8] sm:$0xff]
        %v739 = vld [vmem:[#allocation2 + $0x18] sm:$0xff]
        %v740 = vld [vmem:[#allocation2 + $0x20] sm:$0xff]
        %v741 = vld [vmem:[#allocation2 + $0x30] sm:$0xff]
        %v742 = vld [vmem:[#allocation2 + $0x38] sm:$0xff]
        %v743 = vld [vmem:[#allocation2 + $0x48] sm:$0xff]
        %v744 = vld [vmem:[#allocation2 + $0x50] sm:$0xff]
        %v745 = vperm.slane %v376, 0
        %v746 = vmul.f32 %v737, %v745
        %v747 = vmul.f32 %v738, %v745
        %v748 = vmul.f32 %v739, %v745
        %v749 = vmul.f32 %v740, %v745
        %v750 = vmul.f32 %v741, %v745
        %v751 = vmul.f32 %v742, %v745
        %v752 = vmul.f32 %v743, %v745
        %v753 = vmul.f32 %v744, %v745
        %v754 = vadd.f32 %v746, 0.0
        %v755 = vadd.f32 %v747, 0.0
        %v756 = vadd.f32 %v748, 0.0
        %v757 = vadd.f32 %v749, 0.0
        %v758 = vadd.f32 %v750, 0.0
        %v759 = vadd.f32 %v751, 0.0
        %v760 = vadd.f32 %v752, 0.0
        %v761 = vadd.f32 %v753, 0.0
        %v762 = vld [vmem:[#allocation2 + $0x1] sm:$0xff]
        %v763 = vld [vmem:[#allocation2 + $0x9] sm:$0xff]
        %v764 = vld [vmem:[#allocation2 + $0x19] sm:$0xff]
        %v765 = vld [vmem:[#allocation2 + $0x21] sm:$0xff]
        %v766 = vld [vmem:[#allocation2 + $0x31] sm:$0xff]
        %v767 = vld [vmem:[#allocation2 + $0x39] sm:$0xff]
        %v768 = vld [vmem:[#allocation2 + $0x49] sm:$0xff]
        %v769 = vld [vmem:[#allocation2 + $0x51] sm:$0xff]
        %v770 = vperm.slane %v376, 1
        %v771 = vmul.f32 %v762, %v770
        %v772 = vmul.f32 %v763, %v770
        %v773 = vmul.f32 %v764, %v770
        %v774 = vmul.f32 %v765, %v770
        %v775 = vmul.f32 %v766, %v770
        %v776 = vmul.f32 %v767, %v770
        %v777 = vmul.f32 %v768, %v770
        %v778 = vmul.f32 %v769, %v770
        %v779 = vadd.f32 %v754, %v771
        %v780 = vadd.f32 %v755, %v772
        %v781 = vadd.f32 %v756, %v773
        %v782 = vadd.f32 %v757, %v774
        %v783 = vadd.f32 %v758, %v775
        %v784 = vadd.f32 %v759, %v776
        %v785 = vadd.f32 %v760, %v777
        %v786 = vadd.f32 %v761, %v778
        %v787 = vld [vmem:[#allocation2 + $0x2] sm:$0xff]
        %v788 = vld [vmem:[#allocation2 + $0xa] sm:$0xff]
        %v789 = vld [vmem:[#allocation2 + $0x1a] sm:$0xff]
        %v790 = vld [vmem:[#allocation2 + $0x22] sm:$0xff]
        %v791 = vld [vmem:[#allocation2 + $0x32] sm:$0xff]
        %v792 = vld [vmem:[#allocation2 + $0x3a] sm:$0xff]
        %v793 = vld [vmem:[#allocation2 + $0x4a] sm:$0xff]
        %v794 = vld [vmem:[#allocation2 + $0x52] sm:$0xff]
        %v795 = vperm.slane %v376, 2
        %v796 = vmul.f32 %v787, %v795
        %v797 = vmul.f32 %v788, %v795
        %v798 = vmul.f32 %v789, %v795
        %v799 = vmul.f32 %v790, %v795
        %v800 = vmul.f32 %v791, %v795
        %v801 = vmul.f32 %v792, %v795
        %v802 = vmul.f32 %v793, %v795
        %v803 = vmul.f32 %v794, %v795
        %v804 = vadd.f32 %v779, %v796
        %v805 = vadd.f32 %v780, %v797
        %v806 = vadd.f32 %v781, %v798
        %v807 = vadd.f32 %v782, %v799
        %v808 = vadd.f32 %v783, %v800
        %v809 = vadd.f32 %v784, %v801
        %v810 = vadd.f32 %v785, %v802
        %v811 = vadd.f32 %v786, %v803
        %s812 = scalar_lea.vmem [#allocation2], 24
        %v813 = vld [vmem:[%s812] sm:$0xff]
        %v814 = vld [vmem:[%s812 + $0x8] sm:$0xff]
        %v815 = vld [vmem:[%s812 + $0x18] sm:$0xff]
        %v816 = vld [vmem:[%s812 + $0x20] sm:$0xff]
        %v817 = vld [vmem:[%s812 + $0x30] sm:$0xff]
        %v818 = vld [vmem:[%s812 + $0x38] sm:$0xff]
        %v819 = vld [vmem:[%s812 + $0x48] sm:$0xff]
        %v820 = vld [vmem:[%s812 + $0x50] sm:$0xff]
        %v821 = vperm.slane %v377, 0
        %v822 = vmul.f32 %v813, %v821
        %v823 = vmul.f32 %v814, %v821
        %v824 = vmul.f32 %v815, %v821
        %v825 = vmul.f32 %v816, %v821
        %v826 = vmul.f32 %v817, %v821
        %v827 = vmul.f32 %v818, %v821
        %v828 = vmul.f32 %v819, %v821
        %v829 = vmul.f32 %v820, %v821
        %v830 = vadd.f32 %v804, %v822
        %v831 = vadd.f32 %v805, %v823
        %v832 = vadd.f32 %v806, %v824
        %v833 = vadd.f32 %v807, %v825
        %v834 = vadd.f32 %v808, %v826
        %v835 = vadd.f32 %v809, %v827
        %v836 = vadd.f32 %v810, %v828
        %v837 = vadd.f32 %v811, %v829
        %v838 = vld [vmem:[%s812 + $0x1] sm:$0xff]
        %v839 = vld [vmem:[%s812 + $0x9] sm:$0xff]
        %v840 = vld [vmem:[%s812 + $0x19] sm:$0xff]
        %v841 = vld [vmem:[%s812 + $0x21] sm:$0xff]
        %v842 = vld [vmem:[%s812 + $0x31] sm:$0xff]
        %v843 = vld [vmem:[%s812 + $0x39] sm:$0xff]
        %v844 = vld [vmem:[%s812 + $0x49] sm:$0xff]
        %v845 = vld [vmem:[%s812 + $0x51] sm:$0xff]
        %v846 = vperm.slane %v377, 1
        %v847 = vmul.f32 %v838, %v846
        %v848 = vmul.f32 %v839, %v846
        %v849 = vmul.f32 %v840, %v846
        %v850 = vmul.f32 %v841, %v846
        %v851 = vmul.f32 %v842, %v846
        %v852 = vmul.f32 %v843, %v846
        %v853 = vmul.f32 %v844, %v846
        %v854 = vmul.f32 %v845, %v846
        %v855 = vadd.f32 %v830, %v847
        %v856 = vadd.f32 %v831, %v848
        %v857 = vadd.f32 %v832, %v849
        %v858 = vadd.f32 %v833, %v850
        %v859 = vadd.f32 %v834, %v851
        %v860 = vadd.f32 %v835, %v852
        %v861 = vadd.f32 %v836, %v853
        %v862 = vadd.f32 %v837, %v854
        %v863 = vld [vmem:[%s812 + $0x2] sm:$0xff]
        %v864 = vld [vmem:[%s812 + $0xa] sm:$0xff]
        %v865 = vld [vmem:[%s812 + $0x1a] sm:$0xff]
        %v866 = vld [vmem:[%s812 + $0x22] sm:$0xff]
        %v867 = vld [vmem:[%s812 + $0x32] sm:$0xff]
        %v868 = vld [vmem:[%s812 + $0x3a] sm:$0xff]
        %v869 = vld [vmem:[%s812 + $0x4a] sm:$0xff]
        %v870 = vld [vmem:[%s812 + $0x52] sm:$0xff]
        %v871 = vperm.slane %v377, 2
        %v872 = vmul.f32 %v863, %v871
        %v873 = vmul.f32 %v864, %v871
        %v874 = vmul.f32 %v865, %v871
        %v875 = vmul.f32 %v866, %v871
        %v876 = vmul.f32 %v867, %v871
        %v877 = vmul.f32 %v868, %v871
        %v878 = vmul.f32 %v869, %v871
        %v879 = vmul.f32 %v870, %v871
        %v880 = vadd.f32 %v855, %v872
        %v881 = vadd.f32 %v856, %v873
        %v882 = vadd.f32 %v857, %v874
        %v883 = vadd.f32 %v858, %v875
        %v884 = vadd.f32 %v859, %v876
        %v885 = vadd.f32 %v860, %v877
        %v886 = vadd.f32 %v861, %v878
        %v887 = vadd.f32 %v862, %v879
        %s888 = scalar_lea.vmem [#allocation2], 48
        %v889 = vld [vmem:[%s888] sm:$0xff]
        %v890 = vld [vmem:[%s888 + $0x8] sm:$0xff]
        %v891 = vld [vmem:[%s888 + $0x18] sm:$0xff]
        %v892 = vld [vmem:[%s888 + $0x20] sm:$0xff]
        %v893 = vld [vmem:[%s888 + $0x30] sm:$0xff]
        %v894 = vld [vmem:[%s888 + $0x38] sm:$0xff]
        %v895 = vld [vmem:[%s888 + $0x48] sm:$0xff]
        %v896 = vld [vmem:[%s888 + $0x50] sm:$0xff]
        %v897 = vperm.slane %v378, 0
        %v898 = vmul.f32 %v889, %v897
        %v899 = vmul.f32 %v890, %v897
        %v900 = vmul.f32 %v891, %v897
        %v901 = vmul.f32 %v892, %v897
        %v902 = vmul.f32 %v893, %v897
        %v903 = vmul.f32 %v894, %v897
        %v904 = vmul.f32 %v895, %v897
        %v905 = vmul.f32 %v896, %v897
        %v906 = vadd.f32 %v880, %v898
        %v907 = vadd.f32 %v881, %v899
        %v908 = vadd.f32 %v882, %v900
        %v909 = vadd.f32 %v883, %v901
        %v910 = vadd.f32 %v884, %v902
        %v911 = vadd.f32 %v885, %v903
        %v912 = vadd.f32 %v886, %v904
        %v913 = vadd.f32 %v887, %v905
        %v914 = vld [vmem:[%s888 + $0x1] sm:$0xff]
        %v915 = vld [vmem:[%s888 + $0x9] sm:$0xff]
        %v916 = vld [vmem:[%s888 + $0x19] sm:$0xff]
        %v917 = vld [vmem:[%s888 + $0x21] sm:$0xff]
        %v918 = vld [vmem:[%s888 + $0x31] sm:$0xff]
        %v919 = vld [vmem:[%s888 + $0x39] sm:$0xff]
        %v920 = vld [vmem:[%s888 + $0x49] sm:$0xff]
        %v921 = vld [vmem:[%s888 + $0x51] sm:$0xff]
        %v922 = vperm.slane %v378, 1
        %v923 = vmul.f32 %v914, %v922
        %v924 = vmul.f32 %v915, %v922
        %v925 = vmul.f32 %v916, %v922
        %v926 = vmul.f32 %v917, %v922
        %v927 = vmul.f32 %v918, %v922
        %v928 = vmul.f32 %v919, %v922
        %v929 = vmul.f32 %v920, %v922
        %v930 = vmul.f32 %v921, %v922
        %v931 = vadd.f32 %v906, %v923
        %v932 = vadd.f32 %v907, %v924
        %v933 = vadd.f32 %v908, %v925
        %v934 = vadd.f32 %v909, %v926
        %v935 = vadd.f32 %v910, %v927
        %v936 = vadd.f32 %v911, %v928
        %v937 = vadd.f32 %v912, %v929
        %v938 = vadd.f32 %v913, %v930
        %v939 = vld [vmem:[%s888 + $0x2] sm:$0xff]
        %v940 = vld [vmem:[%s888 + $0xa] sm:$0xff]
        %v941 = vld [vmem:[%s888 + $0x1a] sm:$0xff]
        %v942 = vld [vmem:[%s888 + $0x22] sm:$0xff]
        %v943 = vld [vmem:[%s888 + $0x32] sm:$0xff]
        %v944 = vld [vmem:[%s888 + $0x3a] sm:$0xff]
        %v945 = vld [vmem:[%s888 + $0x4a] sm:$0xff]
        %v946 = vld [vmem:[%s888 + $0x52] sm:$0xff]
        %v947 = vperm.slane %v378, 2
        %v948 = vmul.f32 %v939, %v947
        %v949 = vmul.f32 %v940, %v947
        %v950 = vmul.f32 %v941, %v947
        %v951 = vmul.f32 %v942, %v947
        %v952 = vmul.f32 %v943, %v947
        %v953 = vmul.f32 %v944, %v947
        %v954 = vmul.f32 %v945, %v947
        %v955 = vmul.f32 %v946, %v947
        %v956 = vadd.f32 %v931, %v948
        %v957 = vadd.f32 %v932, %v949
        %v958 = vadd.f32 %v933, %v950
        %v959 = vadd.f32 %v934, %v951
        %v960 = vadd.f32 %v935, %v952
        %v961 = vadd.f32 %v936, %v953
        %v962 = vadd.f32 %v937, %v954
        %v963 = vadd.f32 %v938, %v955
        %v965 = vperm.slane %v379, 0
        %v967 = vmul.f32 %v956, %v965
        %v968 = vmul.f32 %v957, %v965
        %v969 = vmul.f32 %v958, %v965
        %v970 = vmul.f32 %v959, %v965
        %v971 = vmul.f32 %v960, %v965
        %v972 = vmul.f32 %v961, %v965
        %v973 = vmul.f32 %v962, %v965
        %v974 = vmul.f32 %v963, %v965
        %v976 = vperm.slane %v380, 0
        %v978 = vadd.f32 %v967, %v976
        %v979 = vadd.f32 %v968, %v976
        %v980 = vadd.f32 %v969, %v976
        %v981 = vadd.f32 %v970, %v976
        %v982 = vadd.f32 %v971, %v976
        %v983 = vadd.f32 %v972, %v976
        %v984 = vadd.f32 %v973, %v976
        %v985 = vadd.f32 %v974, %v976
        %v986 = vmax.f32 %v978, 0.0
        %v987 = vmax.f32 %v979, 0.0
        %v988 = vmax.f32 %v980, 0.0
        %v989 = vmax.f32 %v981, 0.0
        %v990 = vmax.f32 %v982, 0.0
        %v991 = vmax.f32 %v983, 0.0
        %v992 = vmax.f32 %v984, 0.0
        %v993 = vmax.f32 %v985, 0.0
        %v994 = vmin.f32 %v986, 6.0
        %v995 = vmin.f32 %v987, 6.0
        %v996 = vmin.f32 %v988, 6.0
        %v997 = vmin.f32 %v989, 6.0
        %v998 = vmin.f32 %v990, 6.0
        %v999 = vmin.f32 %v991, 6.0
        %v1000 = vmin.f32 %v992, 6.0
        %v1001 = vmin.f32 %v993, 6.0
        %1002 = vst [vmem:[#allocation3] sm:$0xff] %v994
        %1003 = vst [vmem:[#allocation3 + $0x8] sm:$0xff] %v995
        %1004 = vst [vmem:[#allocation3 + $0x10] sm:$0xff] %v996
        %1005 = vst [vmem:[#allocation3 + $0x18] sm:$0xff] %v997
        %1006 = vst [vmem:[#allocation3 + $0x20] sm:$0xff] %v998
        %1007 = vst [vmem:[#allocation3 + $0x28] sm:$0xff] %v999
        %1008 = vst [vmem:[#allocation3 + $0x30] sm:$0xff] %v1000
        %1009 = vst [vmem:[#allocation3 + $0x38] sm:$0xff] %v1001
        %v1010 = vld [vmem:[#allocation3] sm:$0xff]
        %v1011 = vld [vmem:[#allocation3 + $0x8] sm:$0xff]
        %v1012 = vld [vmem:[#allocation3 + $0x10] sm:$0xff]
        %v1013 = vld [vmem:[#allocation3 + $0x18] sm:$0xff]
        %v1014 = vld [vmem:[#allocation3 + $0x20] sm:$0xff]
        %v1015 = vld [vmem:[#allocation3 + $0x28] sm:$0xff]
        %v1016 = vld [vmem:[#allocation3 + $0x30] sm:$0xff]
        %v1017 = vld [vmem:[#allocation3 + $0x38] sm:$0xff]
        %v1018 = vld [vmem:[%s7] sm:$0xff]
        %v1019 = vld [vmem:[%s7 + $0x8] sm:$0xff]
        %v1020 = vld [vmem:[%s7 + $0x10] sm:$0xff]
        %v1021 = vld [vmem:[%s7 + $0x18] sm:$0xff]
        %v1022 = vld [vmem:[%s7 + $0x20] sm:$0xff]
        %v1023 = vld [vmem:[%s7 + $0x28] sm:$0xff]
        %v1024 = vld [vmem:[%s7 + $0x30] sm:$0xff]
        %v1025 = vld [vmem:[%s7 + $0x38] sm:$0xff]
        %v1026 = vld [vmem:[%s7 + $0x40] sm:$0xff]
        %v1027 = vld [vmem:[%s7 + $0x48] sm:$0xff]
        %v1028 = vld [vmem:[%s7 + $0x50] sm:$0xff]
        %v1029 = vld [vmem:[%s7 + $0x58] sm:$0xff]
        %v1030 = vld [vmem:[%s7 + $0x60] sm:$0xff]
        %v1031 = vld [vmem:[%s7 + $0x68] sm:$0xff]
        %v1032 = vld [vmem:[%s7 + $0x70] sm:$0xff]
        %v1033 = vld [vmem:[%s7 + $0x78] sm:$0xff]
        %1034 = vmatpush.msra.mxu0 %v1033
        %1035 = vmatpush.msra.mxu0 %v1032
        %1036 = vmatpush.msra.mxu0 %v1031
        %1037 = vmatpush.msra.mxu0 %v1030
        %1038 = vmatpush.msra.mxu0 %v1029
        %1039 = vmatpush.msra.mxu0 %v1028
        %1040 = vmatpush.msra.mxu0 %v1027
        %1041 = vmatpush.msra.mxu0 %v1026
        %1042 = vmatpush.msra.mxu0 %v1025
        %1043 = vmatpush.msra.mxu0 %v1024
        %1044 = vmatpush.msra.mxu0 %v1023
        %1045 = vmatpush.msra.mxu0 %v1022
        %1046 = vmatpush.msra.mxu0 %v1021
        %1047 = vmatpush.msra.mxu0 %v1020
        %1048 = vmatpush.msra.mxu0 %v1019
        %1049 = vmatpush.msra.mxu0 %v1018
        %1050 = vmatmul.f32.gmra.mxu0 %v1010
        %v1051 = vpop.f32.mrf.mxu0
        %v1052 = vadd.f32 0.0, %v1051
        %1053 = vmatmul.f32.gmra.mxu0 %v1011
        %v1054 = vpop.f32.mrf.mxu0
        %v1055 = vadd.f32 0.0, %v1054
        %1056 = vmatmul.f32.gmra.mxu0 %v1012
        %v1057 = vpop.f32.mrf.mxu0
        %v1058 = vadd.f32 0.0, %v1057
        %1059 = vmatmul.f32.gmra.mxu0 %v1013
        %v1060 = vpop.f32.mrf.mxu0
        %v1061 = vadd.f32 0.0, %v1060
        %1062 = vmatmul.f32.gmra.mxu0 %v1014
        %v1063 = vpop.f32.mrf.mxu0
        %v1064 = vadd.f32 0.0, %v1063
        %1065 = vmatmul.f32.gmra.mxu0 %v1015
        %v1066 = vpop.f32.mrf.mxu0
        %v1067 = vadd.f32 0.0, %v1066
        %1068 = vmatmul.f32.gmra.mxu0 %v1016
        %v1069 = vpop.f32.mrf.mxu0
        %v1070 = vadd.f32 0.0, %v1069
        %1071 = vmatmul.f32.gmra.mxu0 %v1017
        %v1072 = vpop.f32.mrf.mxu0
        %v1073 = vadd.f32 0.0, %v1072
        %1074 = vdwg.mxu0
        %v1075 = vld [vmem:[%s8] sm:$0x1]
        %v1077 = vperm.slane %v1075, 0
        %v1079 = vmul.f32 %v1052, %v1077
        %v1080 = vmul.f32 %v1055, %v1077
        %v1081 = vmul.f32 %v1058, %v1077
        %v1082 = vmul.f32 %v1061, %v1077
        %v1083 = vmul.f32 %v1064, %v1077
        %v1084 = vmul.f32 %v1067, %v1077
        %v1085 = vmul.f32 %v1070, %v1077
        %v1086 = vmul.f32 %v1073, %v1077
        %v1087 = vld [vmem:[%s9] sm:$0x1]
        %v1089 = vperm.slane %v1087, 0
        %v1091 = vadd.f32 %v1079, %v1089
        %v1092 = vadd.f32 %v1080, %v1089
        %v1093 = vadd.f32 %v1081, %v1089
        %v1094 = vadd.f32 %v1082, %v1089
        %v1095 = vadd.f32 %v1083, %v1089
        %v1096 = vadd.f32 %v1084, %v1089
        %v1097 = vadd.f32 %v1085, %v1089
        %v1098 = vadd.f32 %v1086, %v1089
        %1099 = vst [vmem:[%s366] sm:$0xff] %v1091
        %1100 = vst [vmem:[%s366 + $0x8] sm:$0xff] %v1092
        %1101 = vst [vmem:[%s366 + $0x10] sm:$0xff] %v1093
        %1102 = vst [vmem:[%s366 + $0x18] sm:$0xff] %v1094
        %1103 = vst [vmem:[%s366 + $0x20] sm:$0xff] %v1095
        %1104 = vst [vmem:[%s366 + $0x28] sm:$0xff] %v1096
        %1105 = vst [vmem:[%s366 + $0x30] sm:$0xff] %v1097
        %1106 = vst [vmem:[%s366 + $0x38] sm:$0xff] %v1098
        %s1107 = sand.u32 %s261, 1
        %s1108 = scalar_lea.sflag [#allocation5], %s1107
        %s1109 = sand.u32 %s261, 1
        %s1110 = smul.addr %s1109, 64
        %s1111 = scalar_lea.vmem [#allocation4], %s1110
        // Predicated region
        $region61: #{tpu_custom_call.1} parent=59 // pred_check
          %p1112 = pneg %p271
        $region62: #{tpu_custom_call.1} parent=59 // pred_check_branch
          %1114 = sbr.rel (%p1112) target = $region64
        $region63: #{tpu_custom_call.1} parent=59 // pred_region
          %s1115 = smul.u32 4, %s29
          %1117 = vsyncadd %s1108, 0
          %s1118 = smul.addr %s1115, 2
          %s1119 = smul.addr %s28, 32
          %s1120 = sadd.s32 %s1118, %s1119
          %s1121 = smul.addr %s1120, 8
          %s1122 = scalar_lea.hbm %s10, %s1121
          %s1123 = sshll.u32 %s1111, 4
          %s1124 = int_to_ptr.vmem [resolvable:$true] %s1123
          %s1125 = sshll.u32 %s1122, 4
          %s1126 = int_to_ptr.hbm [resolvable:$true] %s1125
          %1131 = dma.vmem_to_hbm [thread:$0]  %s1124, 1024, %s1126, %s1108, 128, 128, 8
        $region64: #{tpu_custom_call.1} parent=59 // pred_fallthru
          _
      $region60: #{tpu_custom_call.1} parent=5 // pred_fallthru
        _
      %p1132 = scmp.le.s32.totalorder 2, %s19
      // Predicated region
      $region65: #{tpu_custom_call.1} parent=5 // pred_check
        %p1133 = pneg %p1132
      $region66: #{tpu_custom_call.1} parent=5 // pred_check_branch
        %1135 = sbr.rel (%p1133) target = $region68
      $region67: #{tpu_custom_call.1} parent=5 // pred_region
        %s1136 = ssub.s32 %s19, 2
        // Predicated region
        $region69: #{tpu_custom_call.1} parent=67 // pred_check
          %p1137 = pneg %p277
        $region70: #{tpu_custom_call.1} parent=67 // pred_check_branch
          %1139 = sbr.rel (%p1137) target = $region72
        $region71: #{tpu_custom_call.1} parent=67 // pred_region
          %s1140 = sand.u32 %s262, 1
          %s1141 = scalar_lea.sflag [#allocation5], %s1140
          %s1142 = sand.u32 %s262, 1
          %s1143 = smul.addr %s1142, 64
          %s1144 = scalar_lea.vmem [#allocation4], %s1143
          %1146 = dma.done %s1141, 1024
        $region72: #{tpu_custom_call.1} parent=67 // pred_fallthru
          _
      $region68: #{tpu_custom_call.1} parent=5 // pred_fallthru
        _
    $region6: #{tpu_custom_call.1} parent=1 // loop_footer
      %s23 = sadd.s32 1, %s19
    $region7: #{tpu_custom_call.1} parent=1 // loop_footer_branch
      %18 = sbr.rel target = $region3
    $region8: #{tpu_custom_call.1} parent=1 // loop_exit
      _
    %1147 = vsyncpa [#allocation5], 1
    %s1148 = scalar_lea.sflag [#allocation5], 1
    %1149 = vsyncpa %s1148, 1

</llo_original>
